<compile_context>
chip_gen: v7x
topology: tpu7x:2x2x1
jax: 0.10.0
libtpu: 0.0.40
codegen_flags: <defaults>
</compile_context>

<pallas_src>
import functools

import jax
import jax.numpy as jnp
import numpy as np
from jax.experimental import pallas as pl
from jax.experimental.pallas import tpu as pltpu


# ---------------------------------------------------------------------------
# Position-encoder tables (plain JAX glue, matches torch generate_encoder)
# ---------------------------------------------------------------------------
def generate_encoder(in_channels, max_len):
    pos = jnp.arange(max_len, dtype=jnp.float32)[:, None]              # (L, 1)
    i = jnp.arange(in_channels, dtype=jnp.float32)[None, :]            # (1, C)
    angle_rates = 1.0 / jnp.power(10000.0, 2.0 * jnp.floor(i / 2.0) / in_channels)
    pe = pos * angle_rates                                             # (L, C)
    pe = pe.at[:, 0::2].set(jnp.sin(pe[:, 0::2]))
    pe = pe.at[:, 1::2].set(jnp.cos(pe[:, 1::2]))
    return pe                                                          # (L, C)


def _vmem_budget_bytes():
    """Usable VMEM ceiling: physical capacity minus ~25% headroom."""
    try:
        cap = int(pltpu.get_tpu_info().vmem_capacity_bytes)
    except Exception:
        cap = 64 * 2 ** 20                                             # safe for all gens
    return int(cap * 3 // 4)


# ---------------------------------------------------------------------------
# Fused kernel: pool -> stacked scale MLPs -> scaled-PE add, one batch / step
# ---------------------------------------------------------------------------
def _fused_kernel(x_ref, w1_ref, b1_ref, w2h_ref, b2h_ref, w2w_ref, b2w_ref,
                  hpe_ref, wpe_ref, out_ref, *, C, HW):
    # x_ref / out_ref : (C, HWp)   (batch dim squeezed)
    # w1_ref          : (2C, C)    stacked layer-1 weights [h_w1; w_w1]
    # b1_ref          : (2C, 1)
    # w2*_ref / b2*   : (C, C) / (C, 1)
    # hpe_ref/wpe_ref : (C, HWp)   pre-expanded PE tables (x dtype)
    inv_hw = jnp.float32(1.0 / HW)                      # true HW; zero pad is exact
    pooled = jnp.sum(x_ref[...].astype(jnp.float32), axis=1, keepdims=True) * inv_hw

    # One MXU matvec for both layer-1 convs.
    h12 = jnp.dot(w1_ref[...], pooled, preferred_element_type=jnp.float32) + b1_ref[...]
    h12 = jnp.maximum(h12, 0.0)                         # (2C, 1)
    s_h = jax.nn.sigmoid(
        jnp.dot(w2h_ref[...], h12[:C], preferred_element_type=jnp.float32) + b2h_ref[...])
    s_w = jax.nn.sigmoid(
        jnp.dot(w2w_ref[...], h12[C:], preferred_element_type=jnp.float32) + b2w_ref[...])

    # Re-read x here (VMEM loads are cheap) instead of keeping an f32 copy live.
    out_ref[...] = (x_ref[...].astype(jnp.float32)
                    + s_h * hpe_ref[...].astype(jnp.float32)
                    + s_w * wpe_ref[...].astype(jnp.float32)).astype(out_ref.dtype)


# ---------------------------------------------------------------------------
# Fallback add-PE kernel (two-pass path): lane-dense, tiled over (B, HW)
# ---------------------------------------------------------------------------
def _add_pe_kernel(sh_ref, sw_ref, x_ref, hpe_ref, wpe_ref, out_ref):
    out_ref[...] = (x_ref[...].astype(jnp.float32)
                    + sh_ref[...] * hpe_ref[...].astype(jnp.float32)
                    + sw_ref[...] * wpe_ref[...].astype(jnp.float32)).astype(out_ref.dtype)


# ---------------------------------------------------------------------------
# Wrappers
# ---------------------------------------------------------------------------
def _run_fused(x2, params, hpe_hw, wpe_hw, *, HW, single_buffer_consts,
               vmem_limit, cost):
    B, C, HWp = x2.shape

    def const_spec(a):
        nd = a.ndim
        idx = lambda b: (0,) * nd                       # constant index_map
        if single_buffer_consts:
            return pl.BlockSpec(a.shape, idx, pipeline_mode=pl.Buffered(1))
        return pl.BlockSpec(a.shape, idx)

    consts = (params["w1_cat"], params["b1_cat"],
              params["h_w2"], params["h_b2"],
              params["w_w2"], params["w_b2"])

    return pl.pallas_call(
        functools.partial(_fused_kernel, C=C, HW=HW),
        out_shape=jax.ShapeDtypeStruct((B, C, HWp), x2.dtype),
        grid=(B,),
        in_specs=[pl.BlockSpec((None, C, HWp), lambda b: (b, 0, 0))]
                 + [const_spec(a) for a in consts]
                 + [const_spec(hpe_hw), const_spec(wpe_hw)],
        out_specs=pl.BlockSpec((None, C, HWp), lambda b: (b, 0, 0)),
        compiler_params=pltpu.CompilerParams(
            dimension_semantics=("parallel",),
            vmem_limit_bytes=vmem_limit),
        cost_estimate=cost,
    )(x2, *consts, hpe_hw, wpe_hw)


def _run_two_pass(x2, params, hpe_hw, wpe_hw, *, HW, budget, cost):
    """Pool + MLPs as tiny plain-JAX ops, add-PE as an (B, HW)-tiled kernel."""
    B, C, HWp = x2.shape
    itemsize = x2.dtype.itemsize
    pe_item = hpe_hw.dtype.itemsize

    pooled = jnp.mean(x2[:, :, :HW].astype(jnp.float32), axis=2)          # (B, C)
    h12 = jnp.maximum(pooled @ params["w1_cat"].T + params["b1_cat"][:, 0], 0.0)
    s_h = jax.nn.sigmoid(h12[:, :C] @ params["h_w2"].T + params["h_b2"][:, 0])
    s_w = jax.nn.sigmoid(h12[:, C:] @ params["w_w2"].T + params["w_b2"][:, 0])
    s_h = s_h[:, :, None].astype(jnp.float32)                             # (B, C, 1)
    s_w = s_w[:, :, None].astype(jnp.float32)

    # Lane tile: multiple of 128 that divides HWp and fits the budget.
    per_lane = C * (4 * itemsize + 4 * pe_item + 8)
    thw = max(128, (budget // 3) // max(per_lane, 1) // 128 * 128)
    thw = min(thw, HWp)
    while HWp % thw != 0:
        thw -= 128
    n_t = HWp // thw

    need = (4 * C * thw * itemsize                       # x + out, double-buffered
            + 4 * C * thw * pe_item                      # hpe + wpe, double-buffered
            + 2 * C * thw * 4                            # f32 temp headroom
            + 4 * 2 * C * 4)                             # scale vectors
    vmem_limit = int(min(budget, max(16 * 2 ** 20, need + 4 * 2 ** 20)))

    return pl.pallas_call(
        _add_pe_kernel,
        out_shape=jax.ShapeDtypeStruct((B, C, HWp), x2.dtype),
        grid=(B, n_t),
        in_specs=[pl.BlockSpec((None, C, 1), lambda b, t: (b, 0, 0)),
                  pl.BlockSpec((None, C, 1), lambda b, t: (b, 0, 0)),
                  pl.BlockSpec((None, C, thw), lambda b, t: (b, 0, t)),
                  pl.BlockSpec((C, thw), lambda b, t: (0, t)),
                  pl.BlockSpec((C, thw), lambda b, t: (0, t))],
        out_specs=pl.BlockSpec((None, C, thw), lambda b, t: (b, 0, t)),
        compiler_params=pltpu.CompilerParams(
            dimension_semantics=("parallel", "parallel"),
            vmem_limit_bytes=vmem_limit),
        cost_estimate=cost,
    )(s_h, s_w, x2, hpe_hw, wpe_hw)


def adaptive_pe_forward(x, params, hpe_hw, wpe_hw):
    """x: (B, C, H, W) NCHW float array; hpe_hw/wpe_hw: (C, HWp) expanded PE."""
    B, C, H, W = x.shape
    HW = H * W
    HWp = hpe_hw.shape[1]                               # padded to a multiple of 128

    x2 = x.reshape(B, C, HW)                            # free reshape, lane-dense minor dim
    if HWp != HW:
        x2 = jnp.pad(x2, ((0, 0), (0, 0), (0, HWp - HW)))

    itemsize = x2.dtype.itemsize
    pe_item = hpe_hw.dtype.itemsize
    budget = _vmem_budget_bytes()

    cost = pl.CostEstimate(
        flops=int(B * (8 * C * C + 6 * C * HWp)),
        transcendentals=int(2 * B * C),
        bytes_accessed=int(2 * B * C * HWp * itemsize
                           + 2 * C * HWp * pe_item
                           + (4 * C * C + 4 * C) * 4),
    )

    blk = C * HWp
    fused_need = (4 * blk * itemsize                    # x + out blocks, double-buffered
                  + 2 * blk * pe_item                   # PE tables, single-buffered
                  + (4 * C * C + 4 * C) * 4             # weights/biases (f32)
                  + 2 * blk * 4)                        # in-kernel f32 temp headroom

    if fused_need + 4 * 2 ** 20 <= budget:
        vmem_limit = int(min(budget, max(16 * 2 ** 20, fused_need + 4 * 2 ** 20)))
        try:
            out2 = _run_fused(x2, params, hpe_hw, wpe_hw, HW=HW,
                              single_buffer_consts=True,
                              vmem_limit=vmem_limit, cost=cost)
        except Exception:
            # Defensive fallback if pipeline_mode=pl.Buffered(1) is unsupported.
            vmem_limit = int(min(budget, max(16 * 2 ** 20,
                                             fused_need + 2 * blk * pe_item + 4 * 2 ** 20)))
            out2 = _run_fused(x2, params, hpe_hw, wpe_hw, HW=HW,
                              single_buffer_consts=False,
                              vmem_limit=vmem_limit, cost=cost)
    else:
        out2 = _run_two_pass(x2, params, hpe_hw, wpe_hw, HW=HW,
                             budget=budget, cost=cost)

    if HWp != HW:
        out2 = out2[:, :, :HW]
    return out2.reshape(B, C, H, W)


# ---------------------------------------------------------------------------
# Module wrapper
# ---------------------------------------------------------------------------
class Adaptive2DPositionEncoderPallas:
    def __init__(self, in_channels, max_h=200, max_w=200, key=None):
        if key is None:
            key = jax.random.PRNGKey(0)
        C = in_channels
        ks = jax.random.split(key, 8)

        def init(k, shape):
            return (0.1 * jax.random.normal(k, shape)).astype(jnp.float32)

        h_w1, h_b1 = init(ks[0], (C, C)), init(ks[1], (C, 1))
        h_w2, h_b2 = init(ks[2], (C, C)), init(ks[3], (C, 1))
        w_w1, w_b1 = init(ks[4], (C, C)), init(ks[5], (C, 1))
        w_w2, w_b2 = init(ks[6], (C, C)), init(ks[7], (C, 1))

        self.in_channels = C
        # Weights stored in the exact layout the kernel consumes:
        #   conv1x1 weights as (C_out, C_in), biases as (C, 1) columns,
        #   layer-1 weights additionally pre-stacked into one (2C, C) matrix.
        self.params = dict(
            h_pe=generate_encoder(C, max_h).T,          # (C, max_h) f32 base tables
            w_pe=generate_encoder(C, max_w).T,          # (C, max_w)
            h_w1=h_w1, h_b1=h_b1, h_w2=h_w2, h_b2=h_b2,
            w_w1=w_w1, w_b1=w_b1, w_w2=w_w2, w_b2=w_b2,
            w1_cat=jnp.concatenate([h_w1, w_w1], axis=0),   # (2C, C)
            b1_cat=jnp.concatenate([h_b1, w_b1], axis=0),   # (2C, 1)
        )
        self._pe_cache = {}

    def _expanded_pe(self, H, W, dtype):
        """Cache the (C, HWp) expanded PE tables per (H, W, dtype)."""
        key = (int(H), int(W), jnp.dtype(dtype).name)
        if key not in self._pe_cache:
            HW = H * W
            HWp = ((HW + 127) // 128) * 128
            hpe = jnp.repeat(self.params["h_pe"][:, :H], W, axis=1)     # l -> l // W
            wpe = jnp.tile(self.params["w_pe"][:, :W], (1, H))          # l -> l %  W
            if HWp != HW:
                hpe = jnp.pad(hpe, ((0, 0), (0, HWp - HW)))
                wpe = jnp.pad(wpe, ((0, 0), (0, HWp - HW)))
            self._pe_cache[key] = (hpe.astype(dtype), wpe.astype(dtype))
        return self._pe_cache[key]

    def __call__(self, x):
        # TODO(synk): training-mode dropout not implemented (eval-mode identity).
        hpe_hw, wpe_hw = self._expanded_pe(x.shape[2], x.shape[3], x.dtype)
        return adaptive_pe_forward(x, self.params, hpe_hw, wpe_hw)

    # Pure-JAX reference for validation
    def reference(self, x):
        p = self.params
        B, C, H, W = x.shape
        pooled = jnp.mean(x.astype(jnp.float32), axis=(2, 3))           # (B, C)

        def mlp(v, w1, b1, w2, b2):
            h = jnp.maximum(v @ w1.T + b1[:, 0], 0.0)
            return jax.nn.sigmoid(h @ w2.T + b2[:, 0])

        hs = mlp(pooled, p["h_w1"], p["h_b1"], p["h_w2"], p["h_b2"])
        ws = mlp(pooled, p["w_w1"], p["w_b1"], p["w_w2"], p["w_b2"])
        hpe = p["h_pe"][:, :H][None, :, :, None]                        # (1,C,H,1)
        wpe = p["w_pe"][:, :W][None, :, None, :]                        # (1,C,1,W)
        out = (x.astype(jnp.float32)
               + hs[:, :, None, None] * hpe
               + ws[:, :, None, None] * wpe)
        return out.astype(x.dtype)


if __name__ == "__main__":
    B, C, H, W = 2, 8, 16, 16
    key = jax.random.PRNGKey(0)
    k_x, k_p = jax.random.split(key)
    x = jax.random.normal(k_x, (B, C, H, W), dtype=jnp.float32)

    module = Adaptive2DPositionEncoderPallas(in_channels=C, max_h=64, max_w=64, key=k_p)

    out = jax.block_until_ready(module(x))
    ref = jax.block_until_ready(module.reference(x))

    assert out.shape == (B, C, H, W)
    np.testing.assert_allclose(np.asarray(out), np.asarray(ref), rtol=1e-4, atol=1e-5)

    print("KERNEL_OK")
</pallas_src>

<mosaic_0001>
module attributes {stable_mosaic.version = 11 : i64} {
  func.func @_fused_kernel(%arg0: i32, %arg1: memref<1x8x256xf32, #tpu.memory_space<vmem>>, %arg2: memref<16x8xf32, #tpu.memory_space<vmem>>, %arg3: memref<16x1xf32, #tpu.memory_space<vmem>>, %arg4: memref<8x8xf32, #tpu.memory_space<vmem>>, %arg5: memref<8x1xf32, #tpu.memory_space<vmem>>, %arg6: memref<8x8xf32, #tpu.memory_space<vmem>>, %arg7: memref<8x1xf32, #tpu.memory_space<vmem>>, %arg8: memref<8x256xf32, #tpu.memory_space<vmem>>, %arg9: memref<8x256xf32, #tpu.memory_space<vmem>>, %arg10: memref<1x8x256xf32, #tpu.memory_space<vmem>>) attributes {dimension_semantics = [#tpu.dimension_semantics<parallel>], iteration_bounds = array<i64: 2>, scalar_prefetch = 0 : i64, scratch_operands = 0 : i64, tpu.core_type = #tpu.core_type<tc>, window_params = [{transform_indices = @transform_0, window_bounds = array<i64: 1, 8, 256>}, {pipeline_mode = #tpu.pipeline_mode<synchronous>, transform_indices = @transform_1, window_bounds = array<i64: 16, 8>}, {pipeline_mode = #tpu.pipeline_mode<synchronous>, transform_indices = @transform_2, window_bounds = array<i64: 16, 1>}, {pipeline_mode = #tpu.pipeline_mode<synchronous>, transform_indices = @transform_3, window_bounds = array<i64: 8, 8>}, {pipeline_mode = #tpu.pipeline_mode<synchronous>, transform_indices = @transform_4, window_bounds = array<i64: 8, 1>}, {pipeline_mode = #tpu.pipeline_mode<synchronous>, transform_indices = @transform_5, window_bounds = array<i64: 8, 8>}, {pipeline_mode = #tpu.pipeline_mode<synchronous>, transform_indices = @transform_6, window_bounds = array<i64: 8, 1>}, {pipeline_mode = #tpu.pipeline_mode<synchronous>, transform_indices = @transform_7, window_bounds = array<i64: 8, 256>}, {pipeline_mode = #tpu.pipeline_mode<synchronous>, transform_indices = @transform_8, window_bounds = array<i64: 8, 256>}, {transform_indices = @transform_9, window_bounds = array<i64: 1, 8, 256>}]} {
    %c0 = arith.constant 0 : index
    %c0_0 = arith.constant 0 : index
    %c0_1 = arith.constant 0 : index
    %0 = vector.load %arg1[%c0, %c0_0, %c0_1] : memref<1x8x256xf32, #tpu.memory_space<vmem>>, vector<1x8x256xf32>
    %1 = vector.shape_cast %0 : vector<1x8x256xf32> to vector<8x256xf32>
    %cst = arith.constant dense<0.000000e+00> : vector<8xf32>
    %2 = vector.multi_reduction <add>, %1, %cst [1] : vector<8x256xf32> to vector<8xf32>
    %3 = vector.shape_cast %2 : vector<8xf32> to vector<8x1xf32>
    %cst_2 = arith.constant 3.906250e-03 : f32
    %4 = vector.broadcast %cst_2 : f32 to vector<8x1xf32>
    %5 = arith.mulf %3, %4 : vector<8x1xf32>
    %c0_3 = arith.constant 0 : index
    %c0_4 = arith.constant 0 : index
    %6 = vector.load %arg2[%c0_3, %c0_4] : memref<16x8xf32, #tpu.memory_space<vmem>>, vector<16x8xf32>
    %cst_5 = arith.constant dense<0.000000e+00> : vector<16x1xf32>
    %7 = tpu.matmul %6, %5, %cst_5 {dimension_numbers = #tpu.dot_dimension_numbers<[1], [0], [0], [1], [0, 0, 1, 1], [], []>} : vector<16x8xf32>, vector<8x1xf32>, vector<16x1xf32> -> vector<16x1xf32>
    %c0_6 = arith.constant 0 : index
    %c0_7 = arith.constant 0 : index
    %8 = vector.load %arg3[%c0_6, %c0_7] : memref<16x1xf32, #tpu.memory_space<vmem>>, vector<16x1xf32>
    %9 = arith.addf %7, %8 : vector<16x1xf32>
    %cst_8 = arith.constant 0.000000e+00 : f32
    %10 = vector.broadcast %cst_8 : f32 to vector<16x1xf32>
    %11 = arith.maximumf %9, %10 : vector<16x1xf32>
    %c0_9 = arith.constant 0 : index
    %c0_10 = arith.constant 0 : index
    %12 = vector.load %arg4[%c0_9, %c0_10] : memref<8x8xf32, #tpu.memory_space<vmem>>, vector<8x8xf32>
    %13 = vector.extract_strided_slice %11 {offsets = [0, 0], sizes = [8, 1], strides = [1, 1]} : vector<16x1xf32> to vector<8x1xf32>
    %cst_11 = arith.constant dense<0.000000e+00> : vector<8x1xf32>
    %14 = tpu.matmul %12, %13, %cst_11 {dimension_numbers = #tpu.dot_dimension_numbers<[1], [0], [0], [1], [0, 0, 1, 1], [], []>} : vector<8x8xf32>, vector<8x1xf32>, vector<8x1xf32> -> vector<8x1xf32>
    %c0_12 = arith.constant 0 : index
    %c0_13 = arith.constant 0 : index
    %15 = vector.load %arg5[%c0_12, %c0_13] : memref<8x1xf32, #tpu.memory_space<vmem>>, vector<8x1xf32>
    %16 = arith.addf %14, %15 : vector<8x1xf32>
    %17 = arith.negf %16 : vector<8x1xf32>
    %18 = math.exp %17 : vector<8x1xf32>
    %cst_14 = arith.constant 1.000000e+00 : f32
    %19 = vector.broadcast %cst_14 : f32 to vector<8x1xf32>
    %20 = arith.addf %19, %18 : vector<8x1xf32>
    %21 = arith.divf %19, %20 : vector<8x1xf32>
    %c0_15 = arith.constant 0 : index
    %c0_16 = arith.constant 0 : index
    %22 = vector.load %arg6[%c0_15, %c0_16] : memref<8x8xf32, #tpu.memory_space<vmem>>, vector<8x8xf32>
    %23 = vector.extract_strided_slice %11 {offsets = [8, 0], sizes = [8, 1], strides = [1, 1]} : vector<16x1xf32> to vector<8x1xf32>
    %cst_17 = arith.constant dense<0.000000e+00> : vector<8x1xf32>
    %24 = tpu.matmul %22, %23, %cst_17 {dimension_numbers = #tpu.dot_dimension_numbers<[1], [0], [0], [1], [0, 0, 1, 1], [], []>} : vector<8x8xf32>, vector<8x1xf32>, vector<8x1xf32> -> vector<8x1xf32>
    %c0_18 = arith.constant 0 : index
    %c0_19 = arith.constant 0 : index
    %25 = vector.load %arg7[%c0_18, %c0_19] : memref<8x1xf32, #tpu.memory_space<vmem>>, vector<8x1xf32>
    %26 = arith.addf %24, %25 : vector<8x1xf32>
    %27 = arith.negf %26 : vector<8x1xf32>
    %28 = math.exp %27 : vector<8x1xf32>
    %cst_20 = arith.constant 1.000000e+00 : f32
    %29 = vector.broadcast %cst_20 : f32 to vector<8x1xf32>
    %30 = arith.addf %29, %28 : vector<8x1xf32>
    %31 = arith.divf %29, %30 : vector<8x1xf32>
    %c0_21 = arith.constant 0 : index
    %c0_22 = arith.constant 0 : index
    %c0_23 = arith.constant 0 : index
    %32 = vector.load %arg1[%c0_21, %c0_22, %c0_23] : memref<1x8x256xf32, #tpu.memory_space<vmem>>, vector<1x8x256xf32>
    %33 = vector.shape_cast %32 : vector<1x8x256xf32> to vector<8x256xf32>
    %c0_24 = arith.constant 0 : index
    %c0_25 = arith.constant 0 : index
    %34 = vector.load %arg8[%c0_24, %c0_25] : memref<8x256xf32, #tpu.memory_space<vmem>>, vector<8x256xf32>
    %35 = vector.broadcast %21 : vector<8x1xf32> to vector<8x256xf32>
    %36 = arith.mulf %35, %34 : vector<8x256xf32>
    %37 = arith.addf %33, %36 : vector<8x256xf32>
    %c0_26 = arith.constant 0 : index
    %c0_27 = arith.constant 0 : index
    %38 = vector.load %arg9[%c0_26, %c0_27] : memref<8x256xf32, #tpu.memory_space<vmem>>, vector<8x256xf32>
    %39 = vector.broadcast %31 : vector<8x1xf32> to vector<8x256xf32>
    %40 = arith.mulf %39, %38 : vector<8x256xf32>
    %41 = arith.addf %37, %40 : vector<8x256xf32>
    %c0_28 = arith.constant 0 : index
    %c0_29 = arith.constant 0 : index
    %c0_30 = arith.constant 0 : index
    %42 = vector.load %arg10[%c0_28, %c0_29, %c0_30] : memref<1x8x256xf32, #tpu.memory_space<vmem>>, vector<1x8x256xf32>
    %43 = vector.shape_cast %42 : vector<1x8x256xf32> to vector<8x256xf32>
    %44 = vector.shape_cast %41 : vector<8x256xf32> to vector<1x8x256xf32>
    tpu.vector_store %arg10[%c0_28, %c0_29, %c0_30], %44 {strides = array<i32>} : memref<1x8x256xf32, #tpu.memory_space<vmem>>, vector<1x8x256xf32>,
    return
  }
  func.func @transform_0(%arg0: i32) -> (i32, i32, i32) {
    %c0_i32 = arith.constant 0 : i32
    %c0_i32_0 = arith.constant 0 : i32
    %c0_i32_1 = arith.constant 0 : i32
    return %arg0, %c0_i32, %c0_i32_0 : i32, i32, i32
  }
  func.func @transform_1(%arg0: i32) -> (i32, i32) {
    %c0_i32 = arith.constant 0 : i32
    %c0_i32_0 = arith.constant 0 : i32
    %c0_i32_1 = arith.constant 0 : i32
    return %c0_i32, %c0_i32_0 : i32, i32
  }
  func.func @transform_2(%arg0: i32) -> (i32, i32) {
    %c0_i32 = arith.constant 0 : i32
    %c0_i32_0 = arith.constant 0 : i32
    %c0_i32_1 = arith.constant 0 : i32
    return %c0_i32, %c0_i32_0 : i32, i32
  }
  func.func @transform_3(%arg0: i32) -> (i32, i32) {
    %c0_i32 = arith.constant 0 : i32
    %c0_i32_0 = arith.constant 0 : i32
    %c0_i32_1 = arith.constant 0 : i32
    return %c0_i32, %c0_i32_0 : i32, i32
  }
  func.func @transform_4(%arg0: i32) -> (i32, i32) {
    %c0_i32 = arith.constant 0 : i32
    %c0_i32_0 = arith.constant 0 : i32
    %c0_i32_1 = arith.constant 0 : i32
    return %c0_i32, %c0_i32_0 : i32, i32
  }
  func.func @transform_5(%arg0: i32) -> (i32, i32) {
    %c0_i32 = arith.constant 0 : i32
    %c0_i32_0 = arith.constant 0 : i32
    %c0_i32_1 = arith.constant 0 : i32
    return %c0_i32, %c0_i32_0 : i32, i32
  }
  func.func @transform_6(%arg0: i32) -> (i32, i32) {
    %c0_i32 = arith.constant 0 : i32
    %c0_i32_0 = arith.constant 0 : i32
    %c0_i32_1 = arith.constant 0 : i32
    return %c0_i32, %c0_i32_0 : i32, i32
  }
  func.func @transform_7(%arg0: i32) -> (i32, i32) {
    %c0_i32 = arith.constant 0 : i32
    %c0_i32_0 = arith.constant 0 : i32
    %c0_i32_1 = arith.constant 0 : i32
    return %c0_i32, %c0_i32_0 : i32, i32
  }
  func.func @transform_8(%arg0: i32) -> (i32, i32) {
    %c0_i32 = arith.constant 0 : i32
    %c0_i32_0 = arith.constant 0 : i32
    %c0_i32_1 = arith.constant 0 : i32
    return %c0_i32, %c0_i32_0 : i32, i32
  }
  func.func @transform_9(%arg0: i32) -> (i32, i32, i32) {
    %c0_i32 = arith.constant 0 : i32
    %c0_i32_0 = arith.constant 0 : i32
    %c0_i32_1 = arith.constant 0 : i32
    return %arg0, %c0_i32, %c0_i32_0 : i32, i32, i32
  }
}

module attributes {stable_mosaic.version = 11 : i64} {
  func.func @_fused_kernel(%arg0: i32, %arg1: memref<1x8x256xf32, #tpu.memory_space<vmem>>, %arg2: memref<16x8xf32, #tpu.memory_space<vmem>>, %arg3: memref<16x1xf32, #tpu.memory_space<vmem>>, %arg4: memref<8x8xf32, #tpu.memory_space<vmem>>, %arg5: memref<8x1xf32, #tpu.memory_space<vmem>>, %arg6: memref<8x8xf32, #tpu.memory_space<vmem>>, %arg7: memref<8x1xf32, #tpu.memory_space<vmem>>, %arg8: memref<8x256xf32, #tpu.memory_space<vmem>>, %arg9: memref<8x256xf32, #tpu.memory_space<vmem>>, %arg10: memref<1x8x256xf32, #tpu.memory_space<vmem>>) attributes {dimension_semantics = [#tpu.dimension_semantics<parallel>], iteration_bounds = array<i64: 2>, scalar_prefetch = 0 : i64, scratch_operands = 0 : i64, tpu.core_type = #tpu.core_type<tc>, window_params = [{transform_indices = @transform_0, window_bounds = array<i64: 1, 8, 256>}, {pipeline_mode = #tpu.pipeline_mode<synchronous>, transform_indices = @transform_1, window_bounds = array<i64: 16, 8>}, {pipeline_mode = #tpu.pipeline_mode<synchronous>, transform_indices = @transform_2, window_bounds = array<i64: 16, 1>}, {pipeline_mode = #tpu.pipeline_mode<synchronous>, transform_indices = @transform_3, window_bounds = array<i64: 8, 8>}, {pipeline_mode = #tpu.pipeline_mode<synchronous>, transform_indices = @transform_4, window_bounds = array<i64: 8, 1>}, {pipeline_mode = #tpu.pipeline_mode<synchronous>, transform_indices = @transform_5, window_bounds = array<i64: 8, 8>}, {pipeline_mode = #tpu.pipeline_mode<synchronous>, transform_indices = @transform_6, window_bounds = array<i64: 8, 1>}, {pipeline_mode = #tpu.pipeline_mode<synchronous>, transform_indices = @transform_7, window_bounds = array<i64: 8, 256>}, {pipeline_mode = #tpu.pipeline_mode<synchronous>, transform_indices = @transform_8, window_bounds = array<i64: 8, 256>}, {transform_indices = @transform_9, window_bounds = array<i64: 1, 8, 256>}]} {
    %c0 = arith.constant 0 : index
    %c0_0 = arith.constant 0 : index
    %c0_1 = arith.constant 0 : index
    %0 = vector.load %arg1[%c0, %c0_0, %c0_1] : memref<1x8x256xf32, #tpu.memory_space<vmem>>, vector<1x8x256xf32>
    %1 = vector.shape_cast %0 : vector<1x8x256xf32> to vector<8x256xf32>
    %cst = arith.constant dense<0.000000e+00> : vector<8xf32>
    %2 = vector.multi_reduction <add>, %1, %cst [1] : vector<8x256xf32> to vector<8xf32>
    %3 = vector.shape_cast %2 : vector<8xf32> to vector<8x1xf32>
    %cst_2 = arith.constant 3.906250e-03 : f32
    %4 = vector.broadcast %cst_2 : f32 to vector<8x1xf32>
    %5 = arith.mulf %3, %4 : vector<8x1xf32>
    %c0_3 = arith.constant 0 : index
    %c0_4 = arith.constant 0 : index
    %6 = vector.load %arg2[%c0_3, %c0_4] : memref<16x8xf32, #tpu.memory_space<vmem>>, vector<16x8xf32>
    %cst_5 = arith.constant dense<0.000000e+00> : vector<16x1xf32>
    %7 = tpu.matmul %6, %5, %cst_5 {dimension_numbers = #tpu.dot_dimension_numbers<[1], [0], [0], [1], [0, 0, 1, 1], [], []>} : vector<16x8xf32>, vector<8x1xf32>, vector<16x1xf32> -> vector<16x1xf32>
    %c0_6 = arith.constant 0 : index
    %c0_7 = arith.constant 0 : index
    %8 = vector.load %arg3[%c0_6, %c0_7] : memref<16x1xf32, #tpu.memory_space<vmem>>, vector<16x1xf32>
    %9 = arith.addf %7, %8 : vector<16x1xf32>
    %cst_8 = arith.constant 0.000000e+00 : f32
    %10 = vector.broadcast %cst_8 : f32 to vector<16x1xf32>
    %11 = arith.maximumf %9, %10 : vector<16x1xf32>
    %c0_9 = arith.constant 0 : index
    %c0_10 = arith.constant 0 : index
    %12 = vector.load %arg4[%c0_9, %c0_10] : memref<8x8xf32, #tpu.memory_space<vmem>>, vector<8x8xf32>
    %13 = vector.extract_strided_slice %11 {offsets = [0, 0], sizes = [8, 1], strides = [1, 1]} : vector<16x1xf32> to vector<8x1xf32>
    %cst_11 = arith.constant dense<0.000000e+00> : vector<8x1xf32>
    %14 = tpu.matmul %12, %13, %cst_11 {dimension_numbers = #tpu.dot_dimension_numbers<[1], [0], [0], [1], [0, 0, 1, 1], [], []>} : vector<8x8xf32>, vector<8x1xf32>, vector<8x1xf32> -> vector<8x1xf32>
    %c0_12 = arith.constant 0 : index
    %c0_13 = arith.constant 0 : index
    %15 = vector.load %arg5[%c0_12, %c0_13] : memref<8x1xf32, #tpu.memory_space<vmem>>, vector<8x1xf32>
    %16 = arith.addf %14, %15 : vector<8x1xf32>
    %17 = arith.negf %16 : vector<8x1xf32>
    %18 = math.exp %17 : vector<8x1xf32>
    %cst_14 = arith.constant 1.000000e+00 : f32
    %19 = vector.broadcast %cst_14 : f32 to vector<8x1xf32>
    %20 = arith.addf %19, %18 : vector<8x1xf32>
    %21 = arith.divf %19, %20 : vector<8x1xf32>
    %c0_15 = arith.constant 0 : index
    %c0_16 = arith.constant 0 : index
    %22 = vector.load %arg6[%c0_15, %c0_16] : memref<8x8xf32, #tpu.memory_space<vmem>>, vector<8x8xf32>
    %23 = vector.extract_strided_slice %11 {offsets = [8, 0], sizes = [8, 1], strides = [1, 1]} : vector<16x1xf32> to vector<8x1xf32>
    %cst_17 = arith.constant dense<0.000000e+00> : vector<8x1xf32>
    %24 = tpu.matmul %22, %23, %cst_17 {dimension_numbers = #tpu.dot_dimension_numbers<[1], [0], [0], [1], [0, 0, 1, 1], [], []>} : vector<8x8xf32>, vector<8x1xf32>, vector<8x1xf32> -> vector<8x1xf32>
    %c0_18 = arith.constant 0 : index
    %c0_19 = arith.constant 0 : index
    %25 = vector.load %arg7[%c0_18, %c0_19] : memref<8x1xf32, #tpu.memory_space<vmem>>, vector<8x1xf32>
    %26 = arith.addf %24, %25 : vector<8x1xf32>
    %27 = arith.negf %26 : vector<8x1xf32>
    %28 = math.exp %27 : vector<8x1xf32>
    %cst_20 = arith.constant 1.000000e+00 : f32
    %29 = vector.broadcast %cst_20 : f32 to vector<8x1xf32>
    %30 = arith.addf %29, %28 : vector<8x1xf32>
    %31 = arith.divf %29, %30 : vector<8x1xf32>
    %c0_21 = arith.constant 0 : index
    %c0_22 = arith.constant 0 : index
    %c0_23 = arith.constant 0 : index
    %32 = vector.load %arg1[%c0_21, %c0_22, %c0_23] : memref<1x8x256xf32, #tpu.memory_space<vmem>>, vector<1x8x256xf32>
    %33 = vector.shape_cast %32 : vector<1x8x256xf32> to vector<8x256xf32>
    %c0_24 = arith.constant 0 : index
    %c0_25 = arith.constant 0 : index
    %34 = vector.load %arg8[%c0_24, %c0_25] : memref<8x256xf32, #tpu.memory_space<vmem>>, vector<8x256xf32>
    %35 = vector.broadcast %21 : vector<8x1xf32> to vector<8x256xf32>
    %36 = arith.mulf %35, %34 : vector<8x256xf32>
    %37 = arith.addf %33, %36 : vector<8x256xf32>
    %c0_26 = arith.constant 0 : index
    %c0_27 = arith.constant 0 : index
    %38 = vector.load %arg9[%c0_26, %c0_27] : memref<8x256xf32, #tpu.memory_space<vmem>>, vector<8x256xf32>
    %39 = vector.broadcast %31 : vector<8x1xf32> to vector<8x256xf32>
    %40 = arith.mulf %39, %38 : vector<8x256xf32>
    %41 = arith.addf %37, %40 : vector<8x256xf32>
    %c0_28 = arith.constant 0 : index
    %c0_29 = arith.constant 0 : index
    %c0_30 = arith.constant 0 : index
    %42 = vector.load %arg10[%c0_28, %c0_29, %c0_30] : memref<1x8x256xf32, #tpu.memory_space<vmem>>, vector<1x8x256xf32>
    %43 = vector.shape_cast %42 : vector<1x8x256xf32> to vector<8x256xf32>
    %44 = vector.shape_cast %41 : vector<8x256xf32> to vector<1x8x256xf32>
    tpu.vector_store %arg10[%c0_28, %c0_29, %c0_30], %44 {strides = array<i32>} : memref<1x8x256xf32, #tpu.memory_space<vmem>>, vector<1x8x256xf32>,
    return
  }
  func.func @transform_0(%arg0: i32) -> (i32, i32, i32) {
    %c0_i32 = arith.constant 0 : i32
    %c0_i32_0 = arith.constant 0 : i32
    %c0_i32_1 = arith.constant 0 : i32
    return %arg0, %c0_i32, %c0_i32_0 : i32, i32, i32
  }
  func.func @transform_1(%arg0: i32) -> (i32, i32) {
    %c0_i32 = arith.constant 0 : i32
    %c0_i32_0 = arith.constant 0 : i32
    %c0_i32_1 = arith.constant 0 : i32
    return %c0_i32, %c0_i32_0 : i32, i32
  }
  func.func @transform_2(%arg0: i32) -> (i32, i32) {
    %c0_i32 = arith.constant 0 : i32
    %c0_i32_0 = arith.constant 0 : i32
    %c0_i32_1 = arith.constant 0 : i32
    return %c0_i32, %c0_i32_0 : i32, i32
  }
  func.func @transform_3(%arg0: i32) -> (i32, i32) {
    %c0_i32 = arith.constant 0 : i32
    %c0_i32_0 = arith.constant 0 : i32
    %c0_i32_1 = arith.constant 0 : i32
    return %c0_i32, %c0_i32_0 : i32, i32
  }
  func.func @transform_4(%arg0: i32) -> (i32, i32) {
    %c0_i32 = arith.constant 0 : i32
    %c0_i32_0 = arith.constant 0 : i32
    %c0_i32_1 = arith.constant 0 : i32
    return %c0_i32, %c0_i32_0 : i32, i32
  }
  func.func @transform_5(%arg0: i32) -> (i32, i32) {
    %c0_i32 = arith.constant 0 : i32
    %c0_i32_0 = arith.constant 0 : i32
    %c0_i32_1 = arith.constant 0 : i32
    return %c0_i32, %c0_i32_0 : i32, i32
  }
  func.func @transform_6(%arg0: i32) -> (i32, i32) {
    %c0_i32 = arith.constant 0 : i32
    %c0_i32_0 = arith.constant 0 : i32
    %c0_i32_1 = arith.constant 0 : i32
    return %c0_i32, %c0_i32_0 : i32, i32
  }
  func.func @transform_7(%arg0: i32) -> (i32, i32) {
    %c0_i32 = arith.constant 0 : i32
    %c0_i32_0 = arith.constant 0 : i32
    %c0_i32_1 = arith.constant 0 : i32
    return %c0_i32, %c0_i32_0 : i32, i32
  }
  func.func @transform_8(%arg0: i32) -> (i32, i32) {
    %c0_i32 = arith.constant 0 : i32
    %c0_i32_0 = arith.constant 0 : i32
    %c0_i32_1 = arith.constant 0 : i32
    return %c0_i32, %c0_i32_0 : i32, i32
  }
  func.func @transform_9(%arg0: i32) -> (i32, i32, i32) {
    %c0_i32 = arith.constant 0 : i32
    %c0_i32_0 = arith.constant 0 : i32
    %c0_i32_1 = arith.constant 0 : i32
    return %arg0, %c0_i32, %c0_i32_0 : i32, i32, i32
  }
}

</mosaic_0001>

<llo_original>
// kernel: tpu_custom_call.1
$region0: #{tpu_custom_call.1}
  #allocation0 [shape = 'u32[]', space=smem, size = 0x4, offset = 0x4, fixed_abs, tag = 'smem constant byte address 0x4 - core index']
  #allocation1 [shape = 'u32[144,128]{1,0:T(1,128)}', space=vmem, size = 0x12000, scoped, tag = 'internal scratch']
  %s0 = inlined_call_operand.vmem [shape: f32[2,8,256], index: 0, kind: input, shape index: {}]
  %s1 = inlined_call_operand.vmem [shape: f32[16,8], index: 1, kind: input, shape index: {}]
  %s2 = inlined_call_operand.vmem [shape: f32[16,1], index: 2, kind: input, shape index: {}]
  %s3 = inlined_call_operand.hbm [shape: f32[8,8], index: 3, kind: input, shape index: {}]
  %s4 = inlined_call_operand.vmem [shape: f32[8,1], index: 4, kind: input, shape index: {}]
  %s5 = inlined_call_operand.vmem [shape: f32[8,8], index: 5, kind: input, shape index: {}]
  %s6 = inlined_call_operand.vmem [shape: f32[8,1], index: 6, kind: input, shape index: {}]
  %s7 = inlined_call_operand.vmem [shape: f32[8,256], index: 7, kind: input, shape index: {}]
  %s8 = inlined_call_operand.vmem [shape: f32[8,256], index: 8, kind: input, shape index: {}]
  %s9 = inlined_call_operand.hbm [shape: f32[2,8,256], index: 9, kind: output, shape index: {}]
  %s10 = sld [smem:[#allocation0]]
  $region73: #{tpu_custom_call.1} parent=0
    _
  %s12 = ssub.s32 1, %s10
  %s13 = scalar_select 0, %s12, %s10
  $region1: #{tpu_custom_call.1} parent=0
    #allocation2 [shape = 'u8[4096]{0}', space=vmem, size = 0x1000, scoped, tag = 'input window, operand 3, single buffered']
    #allocation3 [shape = 's32[2]{0}', space=sflag, size = 0x8, scoped, tag = 'scoped memory for tpu_custom_call.1']
    #allocation4 [shape = 's32[2]{0}', space=sflag, size = 0x8, scoped, tag = 'scoped memory for tpu_custom_call.1']
    #allocation5 [shape = 'u8[16384]{0}', space=vmem, size = 0x4000, scoped, tag = 'output window, operand 0']
    %14 = vsyncpa [#allocation3], 0
    %15 = vsyncpa [#allocation4], 0
    %s16 = scalar_lea.sflag [#allocation4], 1
    %17 = vsyncpa %s16, 0
    loop: start=0, step=1, limit=4
    $region2: #{tpu_custom_call.1} parent=1 // loop_pre_header
      _
    $region3: #{tpu_custom_call.1} parent=1 // loop_header
      %s19 = sphi 0, %s23
      %p20 = scmp.ge.s32.totalorder %s19, 4
      %s29 = sphi 0, %s31
      %s32 = sphi 0, %s29
      %s33 = sphi 0, %s32
      %s49 = sphi 0, %s33
      %s53 = sphi 0, %s53
      %s55 = sphi 0, %s53
      %s56 = sphi 0, %s55
      %s70 = sphi 0, %s56
      %s74 = sphi 0, %s74
      %s76 = sphi 0, %s74
      %s77 = sphi 0, %s76
      %s91 = sphi 0, %s77
      %s95 = sphi 0, %s95
      %s97 = sphi 0, %s95
      %s98 = sphi 0, %s97
      %s112 = sphi 0, %s98
      %s116 = sphi 0, %s116
      %s118 = sphi 0, %s116
      %s119 = sphi 0, %s118
      %s133 = sphi 0, %s119
      %s137 = sphi 0, %s137
      %s139 = sphi 0, %s137
      %s140 = sphi 0, %s139
      %s154 = sphi 0, %s140
      %s158 = sphi 0, %s158
      %s160 = sphi 0, %s158
      %s161 = sphi 0, %s160
      %s175 = sphi 0, %s161
      %s179 = sphi 0, %s179
      %s181 = sphi 0, %s179
      %s182 = sphi 0, %s181
      %s196 = sphi 0, %s182
      %s200 = sphi 0, %s200
      %s202 = sphi 0, %s200
      %s203 = sphi 0, %s202
      %s217 = sphi 0, %s203
      %s223 = sphi 0, %s225
      %s226 = sphi 0, %s223
      %s227 = sphi 0, %s226
      %s243 = sphi 0, %s227
    $region4: #{tpu_custom_call.1} parent=1 // loop_header_branch
      %22 = sbr.rel (%p20) target = $region8
    $region5: #{tpu_custom_call.1} parent=1 // loop_body
      %s24 = ssub.s32 %s19, 1
      %s25 = ssub.s32 %s19, 2
      %s26 = sadd.s32 %s19, 1
      %s27 = ssub.s32 %s19, %s26
      %p28 = scmp.eq.s32.totalorder %s27, 0
      %s30 = sadd.s32 %s29, 1
      %s31 = scalar_select %p28, %s29, %s30
      %p34 = pneg %p28
      %p35 = scmp.eq.s32.totalorder %s19, 1
      %p36 = por %p34, %p35
      %p37 = scmp.ne.s32.totalorder %s29, %s32
      %p38 = scmp.eq.s32.totalorder %s19, 0
      %p39 = por %p37, %p38
      %p40 = scmp.ne.s32.totalorder %s29, %s32
      %p41 = scmp.eq.s32.totalorder %s24, 1
      %p42 = por %p40, %p41
      %p43 = scmp.ne.s32.totalorder %s32, %s33
      %p44 = scmp.eq.s32.totalorder %s24, 0
      %p45 = por %p43, %p44
      %p46 = scmp.ne.s32.totalorder %s32, %s33
      %p47 = scmp.eq.s32.totalorder %s25, 1
      %p48 = por %p46, %p47
      %p50 = scmp.ne.s32.totalorder %s33, %s49
      %p51 = scmp.eq.s32.totalorder %s25, 0
      %p52 = por %p50, %p51
      %s54 = sadd.s32 %s53, 1
      %p57 = scmp.eq.s32.totalorder %s19, 1
      %p58 = scmp.ne.s32.totalorder %s53, %s55
      %p59 = scmp.eq.s32.totalorder %s19, 0
      %p60 = por %p58, %p59
      %p61 = scmp.ne.s32.totalorder %s53, %s55
      %p62 = scmp.eq.s32.totalorder %s24, 1
      %p63 = por %p61, %p62
      %p64 = scmp.ne.s32.totalorder %s55, %s56
      %p65 = scmp.eq.s32.totalorder %s24, 0
      %p66 = por %p64, %p65
      %p67 = scmp.ne.s32.totalorder %s55, %s56
      %p68 = scmp.eq.s32.totalorder %s25, 1
      %p69 = por %p67, %p68
      %p71 = scmp.ne.s32.totalorder %s56, %s70
      %p72 = scmp.eq.s32.totalorder %s25, 0
      %p73 = por %p71, %p72
      %s75 = sadd.s32 %s74, 1
      %p78 = scmp.eq.s32.totalorder %s19, 1
      %p79 = scmp.ne.s32.totalorder %s74, %s76
      %p80 = scmp.eq.s32.totalorder %s19, 0
      %p81 = por %p79, %p80
      %p82 = scmp.ne.s32.totalorder %s74, %s76
      %p83 = scmp.eq.s32.totalorder %s24, 1
      %p84 = por %p82, %p83
      %p85 = scmp.ne.s32.totalorder %s76, %s77
      %p86 = scmp.eq.s32.totalorder %s24, 0
      %p87 = por %p85, %p86
      %p88 = scmp.ne.s32.totalorder %s76, %s77
      %p89 = scmp.eq.s32.totalorder %s25, 1
      %p90 = por %p88, %p89
      %p92 = scmp.ne.s32.totalorder %s77, %s91
      %p93 = scmp.eq.s32.totalorder %s25, 0
      %p94 = por %p92, %p93
      %s96 = sadd.s32 %s95, 1
      %p99 = scmp.eq.s32.totalorder %s19, 1
      %p100 = scmp.ne.s32.totalorder %s95, %s97
      %p101 = scmp.eq.s32.totalorder %s19, 0
      %p102 = por %p100, %p101
      %p103 = scmp.ne.s32.totalorder %s95, %s97
      %p104 = scmp.eq.s32.totalorder %s24, 1
      %p105 = por %p103, %p104
      %p106 = scmp.ne.s32.totalorder %s97, %s98
      %p107 = scmp.eq.s32.totalorder %s24, 0
      %p108 = por %p106, %p107
      %p109 = scmp.ne.s32.totalorder %s97, %s98
      %p110 = scmp.eq.s32.totalorder %s25, 1
      %p111 = por %p109, %p110
      %p113 = scmp.ne.s32.totalorder %s98, %s112
      %p114 = scmp.eq.s32.totalorder %s25, 0
      %p115 = por %p113, %p114
      %s117 = sadd.s32 %s116, 1
      %p120 = scmp.eq.s32.totalorder %s19, 1
      %p121 = scmp.ne.s32.totalorder %s116, %s118
      %p122 = scmp.eq.s32.totalorder %s19, 0
      %p123 = por %p121, %p122
      %p124 = scmp.ne.s32.totalorder %s116, %s118
      %p125 = scmp.eq.s32.totalorder %s24, 1
      %p126 = por %p124, %p125
      %p127 = scmp.ne.s32.totalorder %s118, %s119
      %p128 = scmp.eq.s32.totalorder %s24, 0
      %p129 = por %p127, %p128
      %p130 = scmp.ne.s32.totalorder %s118, %s119
      %p131 = scmp.eq.s32.totalorder %s25, 1
      %p132 = por %p130, %p131
      %p134 = scmp.ne.s32.totalorder %s119, %s133
      %p135 = scmp.eq.s32.totalorder %s25, 0
      %p136 = por %p134, %p135
      %s138 = sadd.s32 %s137, 1
      %p141 = scmp.eq.s32.totalorder %s19, 1
      %p142 = scmp.ne.s32.totalorder %s137, %s139
      %p143 = scmp.eq.s32.totalorder %s19, 0
      %p144 = por %p142, %p143
      %p145 = scmp.ne.s32.totalorder %s137, %s139
      %p146 = scmp.eq.s32.totalorder %s24, 1
      %p147 = por %p145, %p146
      %p148 = scmp.ne.s32.totalorder %s139, %s140
      %p149 = scmp.eq.s32.totalorder %s24, 0
      %p150 = por %p148, %p149
      %p151 = scmp.ne.s32.totalorder %s139, %s140
      %p152 = scmp.eq.s32.totalorder %s25, 1
      %p153 = por %p151, %p152
      %p155 = scmp.ne.s32.totalorder %s140, %s154
      %p156 = scmp.eq.s32.totalorder %s25, 0
      %p157 = por %p155, %p156
      %s159 = sadd.s32 %s158, 1
      %p162 = scmp.eq.s32.totalorder %s19, 1
      %p163 = scmp.ne.s32.totalorder %s158, %s160
      %p164 = scmp.eq.s32.totalorder %s19, 0
      %p165 = por %p163, %p164
      %p166 = scmp.ne.s32.totalorder %s158, %s160
      %p167 = scmp.eq.s32.totalorder %s24, 1
      %p168 = por %p166, %p167
      %p169 = scmp.ne.s32.totalorder %s160, %s161
      %p170 = scmp.eq.s32.totalorder %s24, 0
      %p171 = por %p169, %p170
      %p172 = scmp.ne.s32.totalorder %s160, %s161
      %p173 = scmp.eq.s32.totalorder %s25, 1
      %p174 = por %p172, %p173
      %p176 = scmp.ne.s32.totalorder %s161, %s175
      %p177 = scmp.eq.s32.totalorder %s25, 0
      %p178 = por %p176, %p177
      %s180 = sadd.s32 %s179, 1
      %p183 = scmp.eq.s32.totalorder %s19, 1
      %p184 = scmp.ne.s32.totalorder %s179, %s181
      %p185 = scmp.eq.s32.totalorder %s19, 0
      %p186 = por %p184, %p185
      %p187 = scmp.ne.s32.totalorder %s179, %s181
      %p188 = scmp.eq.s32.totalorder %s24, 1
      %p189 = por %p187, %p188
      %p190 = scmp.ne.s32.totalorder %s181, %s182
      %p191 = scmp.eq.s32.totalorder %s24, 0
      %p192 = por %p190, %p191
      %p193 = scmp.ne.s32.totalorder %s181, %s182
      %p194 = scmp.eq.s32.totalorder %s25, 1
      %p195 = por %p193, %p194
      %p197 = scmp.ne.s32.totalorder %s182, %s196
      %p198 = scmp.eq.s32.totalorder %s25, 0
      %p199 = por %p197, %p198
      %s201 = sadd.s32 %s200, 1
      %p204 = scmp.eq.s32.totalorder %s19, 1
      %p205 = scmp.ne.s32.totalorder %s200, %s202
      %p206 = scmp.eq.s32.totalorder %s19, 0
      %p207 = por %p205, %p206
      %p208 = scmp.ne.s32.totalorder %s200, %s202
      %p209 = scmp.eq.s32.totalorder %s24, 1
      %p210 = por %p208, %p209
      %p211 = scmp.ne.s32.totalorder %s202, %s203
      %p212 = scmp.eq.s32.totalorder %s24, 0
      %p213 = por %p211, %p212
      %p214 = scmp.ne.s32.totalorder %s202, %s203
      %p215 = scmp.eq.s32.totalorder %s25, 1
      %p216 = por %p214, %p215
      %p218 = scmp.ne.s32.totalorder %s203, %s217
      %p219 = scmp.eq.s32.totalorder %s25, 0
      %p220 = por %p218, %p219
      %s221 = ssub.s32 %s19, %s26
      %p222 = scmp.eq.s32.totalorder %s221, 0
      %s224 = sadd.s32 %s223, 1
      %s225 = scalar_select %p222, %s223, %s224
      %p228 = pneg %p222
      %p229 = scmp.eq.s32.totalorder %s19, 1
      %p230 = por %p228, %p229
      %p231 = scmp.ne.s32.totalorder %s223, %s226
      %p232 = scmp.eq.s32.totalorder %s19, 0
      %p233 = por %p231, %p232
      %p234 = scmp.ne.s32.totalorder %s223, %s226
      %p235 = scmp.eq.s32.totalorder %s24, 1
      %p236 = por %p234, %p235
      %p237 = scmp.ne.s32.totalorder %s226, %s227
      %p238 = scmp.eq.s32.totalorder %s24, 0
      %p239 = por %p237, %p238
      %p240 = scmp.ne.s32.totalorder %s226, %s227
      %p241 = scmp.eq.s32.totalorder %s25, 1
      %p242 = por %p240, %p241
      %p244 = scmp.ne.s32.totalorder %s227, %s243
      %p245 = scmp.eq.s32.totalorder %s25, 0
      %p246 = por %p244, %p245
      %p247 = scmp.le.s32.totalorder 1, %s19
      %p248 = scmp.lt.s32.totalorder %s19, 3
      %p249 = pnand %p247, %p248
      %p250 = pneg %p249
      // Predicated region
      $region9: #{tpu_custom_call.1} parent=5 // pred_check
        _
      $region10: #{tpu_custom_call.1} parent=5 // pred_check_branch
        %252 = sbr.rel (%p249) target = $region12
      $region11: #{tpu_custom_call.1} parent=5 // pred_region
        %s253 = ssub.s32 %s19, 1
        // Predicated region
        $region13: #{tpu_custom_call.1} parent=11 // pred_check
          %p254 = pneg %p66
        $region14: #{tpu_custom_call.1} parent=11 // pred_check_branch
          %256 = sbr.rel (%p254) target = $region16
        $region15: #{tpu_custom_call.1} parent=11 // pred_region
          _
        $region16: #{tpu_custom_call.1} parent=11 // pred_fallthru
          _
        // Predicated region
        $region17: #{tpu_custom_call.1} parent=11 // pred_check
          %p257 = pneg %p87
        $region18: #{tpu_custom_call.1} parent=11 // pred_check_branch
          %259 = sbr.rel (%p257) target = $region20
        $region19: #{tpu_custom_call.1} parent=11 // pred_region
          _
        $region20: #{tpu_custom_call.1} parent=11 // pred_fallthru
          _
        // Predicated region
        $region21: #{tpu_custom_call.1} parent=11 // pred_check
          %p260 = pneg %p108
        $region22: #{tpu_custom_call.1} parent=11 // pred_check_branch
          %262 = sbr.rel (%p260) target = $region24
        $region23: #{tpu_custom_call.1} parent=11 // pred_region
          %s264 = ssub.s32 128, 128
          %265 = vsyncadd [#allocation3], %s264
          %s267 = sshll.u32 [#allocation2], 4
          %s268 = int_to_ptr.vmem [resolvable:$true] %s267
          %270 = dma.hbm_to_vmem [thread:$0]  %s3, 128, %s268, [#allocation3]
        $region24: #{tpu_custom_call.1} parent=11 // pred_fallthru
          _
        // Predicated region
        $region25: #{tpu_custom_call.1} parent=11 // pred_check
          %p271 = pneg %p129
        $region26: #{tpu_custom_call.1} parent=11 // pred_check_branch
          %273 = sbr.rel (%p271) target = $region28
        $region27: #{tpu_custom_call.1} parent=11 // pred_region
          _
        $region28: #{tpu_custom_call.1} parent=11 // pred_fallthru
          _
        // Predicated region
        $region29: #{tpu_custom_call.1} parent=11 // pred_check
          %p274 = pneg %p150
        $region30: #{tpu_custom_call.1} parent=11 // pred_check_branch
          %276 = sbr.rel (%p274) target = $region32
        $region31: #{tpu_custom_call.1} parent=11 // pred_region
          _
        $region32: #{tpu_custom_call.1} parent=11 // pred_fallthru
          _
        // Predicated region
        $region33: #{tpu_custom_call.1} parent=11 // pred_check
          %p277 = pneg %p171
        $region34: #{tpu_custom_call.1} parent=11 // pred_check_branch
          %279 = sbr.rel (%p277) target = $region36
        $region35: #{tpu_custom_call.1} parent=11 // pred_region
          _
        $region36: #{tpu_custom_call.1} parent=11 // pred_fallthru
          _
        // Predicated region
        $region37: #{tpu_custom_call.1} parent=11 // pred_check
          %p280 = pneg %p192
        $region38: #{tpu_custom_call.1} parent=11 // pred_check_branch
          %282 = sbr.rel (%p280) target = $region40
        $region39: #{tpu_custom_call.1} parent=11 // pred_region
          _
        $region40: #{tpu_custom_call.1} parent=11 // pred_fallthru
          _
        // Predicated region
        $region41: #{tpu_custom_call.1} parent=11 // pred_check
          %p283 = pneg %p213
        $region42: #{tpu_custom_call.1} parent=11 // pred_check_branch
          %285 = sbr.rel (%p283) target = $region44
        $region43: #{tpu_custom_call.1} parent=11 // pred_region
          _
        $region44: #{tpu_custom_call.1} parent=11 // pred_fallthru
          _
      $region12: #{tpu_custom_call.1} parent=5 // pred_fallthru
        _
      %p286 = scmp.lt.s32.totalorder %s19, 2
      // Predicated region
      $region45: #{tpu_custom_call.1} parent=5 // pred_check
        %p287 = pneg %p286
      $region46: #{tpu_custom_call.1} parent=5 // pred_check_branch
        %289 = sbr.rel (%p287) target = $region48
      $region47: #{tpu_custom_call.1} parent=5 // pred_region
        // Predicated region
        $region49: #{tpu_custom_call.1} parent=47 // pred_check
          %p290 = pneg %p39
        $region50: #{tpu_custom_call.1} parent=47 // pred_check_branch
          %292 = sbr.rel (%p290) target = $region52
        $region51: #{tpu_custom_call.1} parent=47 // pred_region
          %p293 = scmp.lt.s32.totalorder %s19, 1
          %s294 = scalar_select %p293, %s19, 1
          %s295 = smul.addr %s294, 2
          %s296 = smul.addr %s295, 8
          %s297 = scalar_lea.vmem %s0, %s296
        $region52: #{tpu_custom_call.1} parent=47 // pred_fallthru
          _
      $region48: #{tpu_custom_call.1} parent=5 // pred_fallthru
        _
      %p298 = scmp.le.s32.totalorder 1, %s19
      %p299 = scmp.lt.s32.totalorder %s19, 3
      %p300 = pnand %p298, %p299
      %p301 = pneg %p300
      // Predicated region
      $region53: #{tpu_custom_call.1} parent=5 // pred_check
        _
      $region54: #{tpu_custom_call.1} parent=5 // pred_check_branch
        %303 = sbr.rel (%p300) target = $region56
      $region55: #{tpu_custom_call.1} parent=5 // pred_region
        %s304 = ssub.s32 %s19, 1
        // Predicated region
        $region57: #{tpu_custom_call.1} parent=55 // pred_check
          %p305 = pneg %p108
        $region58: #{tpu_custom_call.1} parent=55 // pred_check_branch
          %307 = sbr.rel (%p305) target = $region60
        $region59: #{tpu_custom_call.1} parent=55 // pred_region
          %308 = dma.done [#allocation3], 128
        $region60: #{tpu_custom_call.1} parent=55 // pred_fallthru
          _
        %p309 = scmp.lt.s32.totalorder %s24, 1
        %s310 = scalar_select %p309, %s24, 1
        %s311 = smul.addr %s310, 2
        %s312 = smul.addr %s311, 8
        %s313 = scalar_lea.vmem %s0, %s312
        %p314 = pneg %p45
        %p315 = pneg %p42
        %p316 = pneg %p66
        %p317 = pneg %p63
        %p318 = pneg %p87
        %p319 = pneg %p84
        %p320 = pneg %p108
        %p321 = pneg %p105
        %p322 = pneg %p129
        %p323 = pneg %p126
        %p324 = pneg %p150
        %p325 = pneg %p147
        %p326 = pneg %p171
        %p327 = pneg %p168
        %p328 = pneg %p192
        %p329 = pneg %p189
        %p330 = pneg %p213
        %p331 = pneg %p210
        %p332 = pneg %p239
        %p333 = pneg %p236
        %s334 = sand.u32 %s226, 1
        %s335 = scalar_lea.sflag [#allocation4], %s334
        %s336 = sand.u32 %s226, 1
        %s337 = smul.addr %s336, 16
        %s338 = scalar_lea.vmem [#allocation5], %s337
        %p339 = scmp.lt.s32.totalorder %s24, 1
        %s340 = scalar_select %p339, %s24, 1
        %s341 = smul.addr %s340, 2
        %s342 = smul.addr %s341, 8
        %s343 = scalar_lea.vmem %s0, %s342
        %v344 = vld [vmem:[%s343] sm:$0xff]
        %v345 = vld [vmem:[%s343 + $0x8] sm:$0xff]
        %v346 = vadd.f32 %v344, %v345
        %347 = vadd.xlane.f32.xlu0 %v346
        %v348 = vpop.xlane.xlu0 %347
        %v349 = vmul.f32 %v348, 0.00390625
        %v350 = vld [vmem:[%s1] sm:$0xff]
        %v351 = vld [vmem:[%s1 + $0x8] sm:$0xff]
        %v352 = vld [vmem:[%s2] sm:$0xff]
        %v353 = vld [vmem:[%s2 + $0x8] sm:$0xff]
        %vm354 = vcmask 64512
        %v356 = vsel %vm354, %v350, 0
        %v359 = vsel %vm354, %v351, 0
        %361 = vmatprep.subr.mxu0 0.0
        %362 = vmatpush1.msra.mxu0 %v349
        %363 = vmatprep.subr.mxu0 0.0
        %364 = vmatpush1.msra.mxu0 0.0
        %365 = vmatprep.subr.mxu0 0.0
        %366 = vmatpush1.msra.mxu0 0.0
        %367 = vmatprep.subr.mxu0 0.0
        %368 = vmatpush1.msra.mxu0 0.0
        %369 = vmatprep.subr.mxu0 0.0
        %370 = vmatpush1.msra.mxu0 0.0
        %371 = vmatprep.subr.mxu0 0.0
        %372 = vmatpush1.msra.mxu0 0.0
        %373 = vmatprep.subr.mxu0 0.0
        %374 = vmatpush1.msra.mxu0 0.0
        %375 = vmatprep.subr.mxu0 0.0
        %376 = vmatpush1.msra.mxu0 0.0
        %377 = vmatprep.subr.mxu0 0.0
        %378 = vmatpush1.msra.mxu0 0.0
        %379 = vmatprep.subr.mxu0 0.0
        %380 = vmatpush1.msra.mxu0 0.0
        %381 = vmatprep.subr.mxu0 0.0
        %382 = vmatpush1.msra.mxu0 0.0
        %383 = vmatprep.subr.mxu0 0.0
        %384 = vmatpush1.msra.mxu0 0.0
        %385 = vmatprep.subr.mxu0 0.0
        %386 = vmatpush1.msra.mxu0 0.0
        %387 = vmatprep.subr.mxu0 0.0
        %388 = vmatpush1.msra.mxu0 0.0
        %389 = vmatprep.subr.mxu0 0.0
        %390 = vmatpush1.msra.mxu0 0.0
        %391 = vmatprep.subr.mxu0 0.0
        %392 = vmatpush1.msra.mxu0 0.0
        %393 = vmatprep.subr.mxu0 0.0
        %394 = vmatpush1.msra.mxu0 0.0
        %395 = vmatprep.subr.mxu0 0.0
        %396 = vmatpush1.msra.mxu0 0.0
        %397 = vmatprep.subr.mxu0 0.0
        %398 = vmatpush1.msra.mxu0 0.0
        %399 = vmatprep.subr.mxu0 0.0
        %400 = vmatpush1.msra.mxu0 0.0
        %401 = vmatprep.subr.mxu0 0.0
        %402 = vmatpush1.msra.mxu0 0.0
        %403 = vmatprep.subr.mxu0 0.0
        %404 = vmatpush1.msra.mxu0 0.0
        %405 = vmatprep.subr.mxu0 0.0
        %406 = vmatpush1.msra.mxu0 0.0
        %407 = vmatprep.subr.mxu0 0.0
        %408 = vmatpush1.msra.mxu0 0.0
        %409 = vmatprep.subr.mxu0 0.0
        %410 = vmatpush1.msra.mxu0 0.0
        %411 = vmatprep.subr.mxu0 0.0
        %412 = vmatpush1.msra.mxu0 0.0
        %413 = vmatprep.subr.mxu0 0.0
        %414 = vmatpush1.msra.mxu0 0.0
        %415 = vmatprep.subr.mxu0 0.0
        %416 = vmatpush1.msra.mxu0 0.0
        %417 = vmatprep.subr.mxu0 0.0
        %418 = vmatpush1.msra.mxu0 0.0
        %419 = vmatprep.subr.mxu0 0.0
        %420 = vmatpush1.msra.mxu0 0.0
        %421 = vmatprep.subr.mxu0 0.0
        %422 = vmatpush1.msra.mxu0 0.0
        %423 = vmatprep.subr.mxu0 0.0
        %424 = vmatpush1.msra.mxu0 0.0
        %425 = vmatprep.mubr.f32.mxu0 0.0
        %426 = vmatmul.mubr.f32.gmra.mrb[0].mxu0 %v356
        %v427 = vpop.f32.mrb[0].mxu0
        %v428 = vadd.f32 %v352, %v427
        %v429 = vpop.f32.mrb[0].mxu0
        %430 = vmatprep.mubr.f32.mxu0 0.0
        %431 = vmatmul.mubr.f32.gmra.mrb[0].mxu0 %v359
        %v432 = vpop.f32.mrb[0].mxu0
        %v433 = vadd.f32 %v353, %v432
        %v434 = vpop.f32.mrb[0].mxu0
        %435 = vdwg.mxu0
        %v436 = vmax.f32 %v428, 0.0
        %v437 = vmax.f32 %v433, 0.0
        %v438 = vld [vmem:[#allocation2] sm:$0xff]
        %v439 = vld [vmem:[%s4] sm:$0xff]
        %v441 = vsel %vm354, %v438, 0
        %443 = vmatprep.subr.mxu0 0.0
        %444 = vmatpush1.msra.mxu0 %v436
        %445 = vmatprep.subr.mxu0 0.0
        %446 = vmatpush1.msra.mxu0 0.0
        %447 = vmatprep.subr.mxu0 0.0
        %448 = vmatpush1.msra.mxu0 0.0
        %449 = vmatprep.subr.mxu0 0.0
        %450 = vmatpush1.msra.mxu0 0.0
        %451 = vmatprep.subr.mxu0 0.0
        %452 = vmatpush1.msra.mxu0 0.0
        %453 = vmatprep.subr.mxu0 0.0
        %454 = vmatpush1.msra.mxu0 0.0
        %455 = vmatprep.subr.mxu0 0.0
        %456 = vmatpush1.msra.mxu0 0.0
        %457 = vmatprep.subr.mxu0 0.0
        %458 = vmatpush1.msra.mxu0 0.0
        %459 = vmatprep.subr.mxu0 0.0
        %460 = vmatpush1.msra.mxu0 0.0
        %461 = vmatprep.subr.mxu0 0.0
        %462 = vmatpush1.msra.mxu0 0.0
        %463 = vmatprep.subr.mxu0 0.0
        %464 = vmatpush1.msra.mxu0 0.0
        %465 = vmatprep.subr.mxu0 0.0
        %466 = vmatpush1.msra.mxu0 0.0
        %467 = vmatprep.subr.mxu0 0.0
        %468 = vmatpush1.msra.mxu0 0.0
        %469 = vmatprep.subr.mxu0 0.0
        %470 = vmatpush1.msra.mxu0 0.0
        %471 = vmatprep.subr.mxu0 0.0
        %472 = vmatpush1.msra.mxu0 0.0
        %473 = vmatprep.subr.mxu0 0.0
        %474 = vmatpush1.msra.mxu0 0.0
        %475 = vmatprep.subr.mxu0 0.0
        %476 = vmatpush1.msra.mxu0 0.0
        %477 = vmatprep.subr.mxu0 0.0
        %478 = vmatpush1.msra.mxu0 0.0
        %479 = vmatprep.subr.mxu0 0.0
        %480 = vmatpush1.msra.mxu0 0.0
        %481 = vmatprep.subr.mxu0 0.0
        %482 = vmatpush1.msra.mxu0 0.0
        %483 = vmatprep.subr.mxu0 0.0
        %484 = vmatpush1.msra.mxu0 0.0
        %485 = vmatprep.subr.mxu0 0.0
        %486 = vmatpush1.msra.mxu0 0.0
        %487 = vmatprep.subr.mxu0 0.0
        %488 = vmatpush1.msra.mxu0 0.0
        %489 = vmatprep.subr.mxu0 0.0
        %490 = vmatpush1.msra.mxu0 0.0
        %491 = vmatprep.subr.mxu0 0.0
        %492 = vmatpush1.msra.mxu0 0.0
        %493 = vmatprep.subr.mxu0 0.0
        %494 = vmatpush1.msra.mxu0 0.0
        %495 = vmatprep.subr.mxu0 0.0
        %496 = vmatpush1.msra.mxu0 0.0
        %497 = vmatprep.subr.mxu0 0.0
        %498 = vmatpush1.msra.mxu0 0.0
        %499 = vmatprep.subr.mxu0 0.0
        %500 = vmatpush1.msra.mxu0 0.0
        %501 = vmatprep.subr.mxu0 0.0
        %502 = vmatpush1.msra.mxu0 0.0
        %503 = vmatprep.subr.mxu0 0.0
        %504 = vmatpush1.msra.mxu0 0.0
        %505 = vmatprep.subr.mxu0 0.0
        %506 = vmatpush1.msra.mxu0 0.0
        %507 = vmatprep.mubr.f32.mxu0 0.0
        %508 = vmatmul.mubr.f32.gmra.mrb[0].mxu0 %v441
        %v509 = vpop.f32.mrb[0].mxu0
        %v510 = vadd.f32 %v439, %v509
        %v511 = vpop.f32.mrb[0].mxu0
        %512 = vdwg.mxu0
        %v513 = vxor.u32 %v510, 2147483648
        %v514 = vmul.f32 %v513, 1.442695
        %v515 = vpow.pop %v514
        %v516 = vadd.f32 %v515, 1.0
        %v517 = vrcp.pop %v516
        %v518 = vmul.f32 1.0, %v517
        %v519 = vld [vmem:[%s5] sm:$0xff]
        %v520 = vld [vmem:[%s6] sm:$0xff]
        %v522 = vsel %vm354, %v519, 0
        %524 = vmatprep.subr.mxu0 0.0
        %525 = vmatpush1.msra.mxu0 %v437
        %526 = vmatprep.subr.mxu0 0.0
        %527 = vmatpush1.msra.mxu0 0.0
        %528 = vmatprep.subr.mxu0 0.0
        %529 = vmatpush1.msra.mxu0 0.0
        %530 = vmatprep.subr.mxu0 0.0
        %531 = vmatpush1.msra.mxu0 0.0
        %532 = vmatprep.subr.mxu0 0.0
        %533 = vmatpush1.msra.mxu0 0.0
        %534 = vmatprep.subr.mxu0 0.0
        %535 = vmatpush1.msra.mxu0 0.0
        %536 = vmatprep.subr.mxu0 0.0
        %537 = vmatpush1.msra.mxu0 0.0
        %538 = vmatprep.subr.mxu0 0.0
        %539 = vmatpush1.msra.mxu0 0.0
        %540 = vmatprep.subr.mxu0 0.0
        %541 = vmatpush1.msra.mxu0 0.0
        %542 = vmatprep.subr.mxu0 0.0
        %543 = vmatpush1.msra.mxu0 0.0
        %544 = vmatprep.subr.mxu0 0.0
        %545 = vmatpush1.msra.mxu0 0.0
        %546 = vmatprep.subr.mxu0 0.0
        %547 = vmatpush1.msra.mxu0 0.0
        %548 = vmatprep.subr.mxu0 0.0
        %549 = vmatpush1.msra.mxu0 0.0
        %550 = vmatprep.subr.mxu0 0.0
        %551 = vmatpush1.msra.mxu0 0.0
        %552 = vmatprep.subr.mxu0 0.0
        %553 = vmatpush1.msra.mxu0 0.0
        %554 = vmatprep.subr.mxu0 0.0
        %555 = vmatpush1.msra.mxu0 0.0
        %556 = vmatprep.subr.mxu0 0.0
        %557 = vmatpush1.msra.mxu0 0.0
        %558 = vmatprep.subr.mxu0 0.0
        %559 = vmatpush1.msra.mxu0 0.0
        %560 = vmatprep.subr.mxu0 0.0
        %561 = vmatpush1.msra.mxu0 0.0
        %562 = vmatprep.subr.mxu0 0.0
        %563 = vmatpush1.msra.mxu0 0.0
        %564 = vmatprep.subr.mxu0 0.0
        %565 = vmatpush1.msra.mxu0 0.0
        %566 = vmatprep.subr.mxu0 0.0
        %567 = vmatpush1.msra.mxu0 0.0
        %568 = vmatprep.subr.mxu0 0.0
        %569 = vmatpush1.msra.mxu0 0.0
        %570 = vmatprep.subr.mxu0 0.0
        %571 = vmatpush1.msra.mxu0 0.0
        %572 = vmatprep.subr.mxu0 0.0
        %573 = vmatpush1.msra.mxu0 0.0
        %574 = vmatprep.subr.mxu0 0.0
        %575 = vmatpush1.msra.mxu0 0.0
        %576 = vmatprep.subr.mxu0 0.0
        %577 = vmatpush1.msra.mxu0 0.0
        %578 = vmatprep.subr.mxu0 0.0
        %579 = vmatpush1.msra.mxu0 0.0
        %580 = vmatprep.subr.mxu0 0.0
        %581 = vmatpush1.msra.mxu0 0.0
        %582 = vmatprep.subr.mxu0 0.0
        %583 = vmatpush1.msra.mxu0 0.0
        %584 = vmatprep.subr.mxu0 0.0
        %585 = vmatpush1.msra.mxu0 0.0
        %586 = vmatprep.subr.mxu0 0.0
        %587 = vmatpush1.msra.mxu0 0.0
        %588 = vmatprep.mubr.f32.mxu0 0.0
        %589 = vmatmul.mubr.f32.gmra.mrb[0].mxu0 %v522
        %v590 = vpop.f32.mrb[0].mxu0
        %v591 = vadd.f32 %v520, %v590
        %v592 = vpop.f32.mrb[0].mxu0
        %593 = vdwg.mxu0
        %v594 = vxor.u32 %v591, 2147483648
        %v595 = vmul.f32 %v594, 1.442695
        %v596 = vpow.pop %v595
        %v597 = vadd.f32 %v596, 1.0
        %v598 = vrcp.pop %v597
        %v599 = vmul.f32 1.0, %v598
        %v600 = vld [vmem:[%s7] sm:$0xff]
        %v601 = vld [vmem:[%s7 + $0x8] sm:$0xff]
        %603 = vset.pattern.permute.xlu0 0
        %604 = vperm.xlu0 %603, %v518
        %v605 = vpop.permute.xlu0 %604
        %v607 = vmul.f32 %v605, %v600
        %v608 = vmul.f32 %v605, %v601
        %v609 = vadd.f32 %v344, %v607
        %v610 = vadd.f32 %v345, %v608
        %v611 = vld [vmem:[%s8] sm:$0xff]
        %v612 = vld [vmem:[%s8 + $0x8] sm:$0xff]
        %614 = vset.pattern.permute.xlu0 0
        %615 = vperm.xlu0 %614, %v599
        %v616 = vpop.permute.xlu0 %615
        %v618 = vmul.f32 %v616, %v611
        %v619 = vmul.f32 %v616, %v612
        %v620 = vadd.f32 %v609, %v618
        %v621 = vadd.f32 %v610, %v619
        %622 = vst [vmem:[%s338] sm:$0xff] %v620
        %623 = vst [vmem:[%s338 + $0x8] sm:$0xff] %v621
        %s624 = sand.u32 %s226, 1
        %s625 = scalar_lea.sflag [#allocation4], %s624
        %s626 = sand.u32 %s226, 1
        %s627 = smul.addr %s626, 16
        %s628 = scalar_lea.vmem [#allocation5], %s627
        // Predicated region
        $region61: #{tpu_custom_call.1} parent=55 // pred_check
          %p629 = pneg %p236
        $region62: #{tpu_custom_call.1} parent=55 // pred_check_branch
          %631 = sbr.rel (%p629) target = $region64
        $region63: #{tpu_custom_call.1} parent=55 // pred_region
          %s633 = ssub.s32 256, 256
          %634 = vsyncadd %s625, %s633
          %s635 = smul.addr %s24, 2
          %s636 = smul.addr %s635, 128
          %s637 = scalar_lea.hbm %s9, %s636
          %s639 = sshll.u32 %s628, 4
          %s640 = int_to_ptr.vmem [resolvable:$true] %s639
          %642 = dma.vmem_to_hbm [thread:$0]  %s640, 256, %s637, %s625
        $region64: #{tpu_custom_call.1} parent=55 // pred_fallthru
          _
      $region56: #{tpu_custom_call.1} parent=5 // pred_fallthru
        _
      %p643 = scmp.le.s32.totalorder 2, %s19
      // Predicated region
      $region65: #{tpu_custom_call.1} parent=5 // pred_check
        %p644 = pneg %p643
      $region66: #{tpu_custom_call.1} parent=5 // pred_check_branch
        %646 = sbr.rel (%p644) target = $region68
      $region67: #{tpu_custom_call.1} parent=5 // pred_region
        %s647 = ssub.s32 %s19, 2
        // Predicated region
        $region69: #{tpu_custom_call.1} parent=67 // pred_check
          %p648 = pneg %p242
        $region70: #{tpu_custom_call.1} parent=67 // pred_check_branch
          %650 = sbr.rel (%p648) target = $region72
        $region71: #{tpu_custom_call.1} parent=67 // pred_region
          %s651 = sand.u32 %s227, 1
          %s652 = scalar_lea.sflag [#allocation4], %s651
          %s653 = sand.u32 %s227, 1
          %s654 = smul.addr %s653, 16
          %s655 = scalar_lea.vmem [#allocation5], %s654
          %656 = dma.done %s652, 256
        $region72: #{tpu_custom_call.1} parent=67 // pred_fallthru
          _
      $region68: #{tpu_custom_call.1} parent=5 // pred_fallthru
        _
    $region6: #{tpu_custom_call.1} parent=1 // loop_footer
      %s23 = sadd.s32 1, %s19
    $region7: #{tpu_custom_call.1} parent=1 // loop_footer_branch
      %18 = sbr.rel target = $region3
    $region8: #{tpu_custom_call.1} parent=1 // loop_exit
      _
    %657 = vsyncpa [#allocation3], 1
    %s658 = scalar_lea.sflag [#allocation3], 1
    %659 = vsyncpa %s658, 1
    %660 = vsyncpa [#allocation4], 1
    %s661 = scalar_lea.sflag [#allocation4], 1
    %662 = vsyncpa %s661, 1

// kernel: tpu_custom_call.1
$region0: #{tpu_custom_call.1}
  #allocation0 [shape = 'u32[]', space=smem, size = 0x4, offset = 0x4, fixed_abs, tag = 'smem constant byte address 0x4 - core index']
  #allocation1 [shape = 'u32[144,128]{1,0:T(1,128)}', space=vmem, size = 0x12000, scoped, tag = 'internal scratch']
  %s0 = inlined_call_operand.vmem [shape: f32[2,8,256], index: 0, kind: input, shape index: {}]
  %s1 = inlined_call_operand.vmem [shape: f32[16,8], index: 1, kind: input, shape index: {}]
  %s2 = inlined_call_operand.vmem [shape: f32[16,1], index: 2, kind: input, shape index: {}]
  %s3 = inlined_call_operand.hbm [shape: f32[8,8], index: 3, kind: input, shape index: {}]
  %s4 = inlined_call_operand.vmem [shape: f32[8,1], index: 4, kind: input, shape index: {}]
  %s5 = inlined_call_operand.vmem [shape: f32[8,8], index: 5, kind: input, shape index: {}]
  %s6 = inlined_call_operand.vmem [shape: f32[8,1], index: 6, kind: input, shape index: {}]
  %s7 = inlined_call_operand.vmem [shape: f32[8,256], index: 7, kind: input, shape index: {}]
  %s8 = inlined_call_operand.vmem [shape: f32[8,256], index: 8, kind: input, shape index: {}]
  %s9 = inlined_call_operand.hbm [shape: f32[2,8,256], index: 9, kind: output, shape index: {}]
  %s10 = sld [smem:[#allocation0]]
  $region73: #{tpu_custom_call.1} parent=0
    _
  %s12 = ssub.s32 1, %s10
  %s13 = scalar_select 0, %s12, %s10
  $region1: #{tpu_custom_call.1} parent=0
    #allocation2 [shape = 'u8[4096]{0}', space=vmem, size = 0x1000, scoped, tag = 'input window, operand 3, single buffered']
    #allocation3 [shape = 's32[2]{0}', space=sflag, size = 0x8, scoped, tag = 'scoped memory for tpu_custom_call.1']
    #allocation4 [shape = 's32[2]{0}', space=sflag, size = 0x8, scoped, tag = 'scoped memory for tpu_custom_call.1']
    #allocation5 [shape = 'u8[16384]{0}', space=vmem, size = 0x4000, scoped, tag = 'output window, operand 0']
    %14 = vsyncpa [#allocation3], 0
    %15 = vsyncpa [#allocation4], 0
    %s16 = scalar_lea.sflag [#allocation4], 1
    %17 = vsyncpa %s16, 0
    loop: start=0, step=1, limit=4
    $region2: #{tpu_custom_call.1} parent=1 // loop_pre_header
      _
    $region3: #{tpu_custom_call.1} parent=1 // loop_header
      %s19 = sphi 0, %s23
      %p20 = scmp.ge.s32.totalorder %s19, 4
      %s29 = sphi 0, %s31
      %s32 = sphi 0, %s29
      %s33 = sphi 0, %s32
      %s49 = sphi 0, %s33
      %s53 = sphi 0, %s53
      %s55 = sphi 0, %s53
      %s56 = sphi 0, %s55
      %s70 = sphi 0, %s56
      %s74 = sphi 0, %s74
      %s76 = sphi 0, %s74
      %s77 = sphi 0, %s76
      %s91 = sphi 0, %s77
      %s95 = sphi 0, %s95
      %s97 = sphi 0, %s95
      %s98 = sphi 0, %s97
      %s112 = sphi 0, %s98
      %s116 = sphi 0, %s116
      %s118 = sphi 0, %s116
      %s119 = sphi 0, %s118
      %s133 = sphi 0, %s119
      %s137 = sphi 0, %s137
      %s139 = sphi 0, %s137
      %s140 = sphi 0, %s139
      %s154 = sphi 0, %s140
      %s158 = sphi 0, %s158
      %s160 = sphi 0, %s158
      %s161 = sphi 0, %s160
      %s175 = sphi 0, %s161
      %s179 = sphi 0, %s179
      %s181 = sphi 0, %s179
      %s182 = sphi 0, %s181
      %s196 = sphi 0, %s182
      %s200 = sphi 0, %s200
      %s202 = sphi 0, %s200
      %s203 = sphi 0, %s202
      %s217 = sphi 0, %s203
      %s223 = sphi 0, %s225
      %s226 = sphi 0, %s223
      %s227 = sphi 0, %s226
      %s243 = sphi 0, %s227
    $region4: #{tpu_custom_call.1} parent=1 // loop_header_branch
      %22 = sbr.rel (%p20) target = $region8
    $region5: #{tpu_custom_call.1} parent=1 // loop_body
      %s24 = ssub.s32 %s19, 1
      %s25 = ssub.s32 %s19, 2
      %s26 = sadd.s32 %s19, 1
      %s27 = ssub.s32 %s19, %s26
      %p28 = scmp.eq.s32.totalorder %s27, 0
      %s30 = sadd.s32 %s29, 1
      %s31 = scalar_select %p28, %s29, %s30
      %p34 = pneg %p28
      %p35 = scmp.eq.s32.totalorder %s19, 1
      %p36 = por %p34, %p35
      %p37 = scmp.ne.s32.totalorder %s29, %s32
      %p38 = scmp.eq.s32.totalorder %s19, 0
      %p39 = por %p37, %p38
      %p40 = scmp.ne.s32.totalorder %s29, %s32
      %p41 = scmp.eq.s32.totalorder %s24, 1
      %p42 = por %p40, %p41
      %p43 = scmp.ne.s32.totalorder %s32, %s33
      %p44 = scmp.eq.s32.totalorder %s24, 0
      %p45 = por %p43, %p44
      %p46 = scmp.ne.s32.totalorder %s32, %s33
      %p47 = scmp.eq.s32.totalorder %s25, 1
      %p48 = por %p46, %p47
      %p50 = scmp.ne.s32.totalorder %s33, %s49
      %p51 = scmp.eq.s32.totalorder %s25, 0
      %p52 = por %p50, %p51
      %s54 = sadd.s32 %s53, 1
      %p57 = scmp.eq.s32.totalorder %s19, 1
      %p58 = scmp.ne.s32.totalorder %s53, %s55
      %p59 = scmp.eq.s32.totalorder %s19, 0
      %p60 = por %p58, %p59
      %p61 = scmp.ne.s32.totalorder %s53, %s55
      %p62 = scmp.eq.s32.totalorder %s24, 1
      %p63 = por %p61, %p62
      %p64 = scmp.ne.s32.totalorder %s55, %s56
      %p65 = scmp.eq.s32.totalorder %s24, 0
      %p66 = por %p64, %p65
      %p67 = scmp.ne.s32.totalorder %s55, %s56
      %p68 = scmp.eq.s32.totalorder %s25, 1
      %p69 = por %p67, %p68
      %p71 = scmp.ne.s32.totalorder %s56, %s70
      %p72 = scmp.eq.s32.totalorder %s25, 0
      %p73 = por %p71, %p72
      %s75 = sadd.s32 %s74, 1
      %p78 = scmp.eq.s32.totalorder %s19, 1
      %p79 = scmp.ne.s32.totalorder %s74, %s76
      %p80 = scmp.eq.s32.totalorder %s19, 0
      %p81 = por %p79, %p80
      %p82 = scmp.ne.s32.totalorder %s74, %s76
      %p83 = scmp.eq.s32.totalorder %s24, 1
      %p84 = por %p82, %p83
      %p85 = scmp.ne.s32.totalorder %s76, %s77
      %p86 = scmp.eq.s32.totalorder %s24, 0
      %p87 = por %p85, %p86
      %p88 = scmp.ne.s32.totalorder %s76, %s77
      %p89 = scmp.eq.s32.totalorder %s25, 1
      %p90 = por %p88, %p89
      %p92 = scmp.ne.s32.totalorder %s77, %s91
      %p93 = scmp.eq.s32.totalorder %s25, 0
      %p94 = por %p92, %p93
      %s96 = sadd.s32 %s95, 1
      %p99 = scmp.eq.s32.totalorder %s19, 1
      %p100 = scmp.ne.s32.totalorder %s95, %s97
      %p101 = scmp.eq.s32.totalorder %s19, 0
      %p102 = por %p100, %p101
      %p103 = scmp.ne.s32.totalorder %s95, %s97
      %p104 = scmp.eq.s32.totalorder %s24, 1
      %p105 = por %p103, %p104
      %p106 = scmp.ne.s32.totalorder %s97, %s98
      %p107 = scmp.eq.s32.totalorder %s24, 0
      %p108 = por %p106, %p107
      %p109 = scmp.ne.s32.totalorder %s97, %s98
      %p110 = scmp.eq.s32.totalorder %s25, 1
      %p111 = por %p109, %p110
      %p113 = scmp.ne.s32.totalorder %s98, %s112
      %p114 = scmp.eq.s32.totalorder %s25, 0
      %p115 = por %p113, %p114
      %s117 = sadd.s32 %s116, 1
      %p120 = scmp.eq.s32.totalorder %s19, 1
      %p121 = scmp.ne.s32.totalorder %s116, %s118
      %p122 = scmp.eq.s32.totalorder %s19, 0
      %p123 = por %p121, %p122
      %p124 = scmp.ne.s32.totalorder %s116, %s118
      %p125 = scmp.eq.s32.totalorder %s24, 1
      %p126 = por %p124, %p125
      %p127 = scmp.ne.s32.totalorder %s118, %s119
      %p128 = scmp.eq.s32.totalorder %s24, 0
      %p129 = por %p127, %p128
      %p130 = scmp.ne.s32.totalorder %s118, %s119
      %p131 = scmp.eq.s32.totalorder %s25, 1
      %p132 = por %p130, %p131
      %p134 = scmp.ne.s32.totalorder %s119, %s133
      %p135 = scmp.eq.s32.totalorder %s25, 0
      %p136 = por %p134, %p135
      %s138 = sadd.s32 %s137, 1
      %p141 = scmp.eq.s32.totalorder %s19, 1
      %p142 = scmp.ne.s32.totalorder %s137, %s139
      %p143 = scmp.eq.s32.totalorder %s19, 0
      %p144 = por %p142, %p143
      %p145 = scmp.ne.s32.totalorder %s137, %s139
      %p146 = scmp.eq.s32.totalorder %s24, 1
      %p147 = por %p145, %p146
      %p148 = scmp.ne.s32.totalorder %s139, %s140
      %p149 = scmp.eq.s32.totalorder %s24, 0
      %p150 = por %p148, %p149
      %p151 = scmp.ne.s32.totalorder %s139, %s140
      %p152 = scmp.eq.s32.totalorder %s25, 1
      %p153 = por %p151, %p152
      %p155 = scmp.ne.s32.totalorder %s140, %s154
      %p156 = scmp.eq.s32.totalorder %s25, 0
      %p157 = por %p155, %p156
      %s159 = sadd.s32 %s158, 1
      %p162 = scmp.eq.s32.totalorder %s19, 1
      %p163 = scmp.ne.s32.totalorder %s158, %s160
      %p164 = scmp.eq.s32.totalorder %s19, 0
      %p165 = por %p163, %p164
      %p166 = scmp.ne.s32.totalorder %s158, %s160
      %p167 = scmp.eq.s32.totalorder %s24, 1
      %p168 = por %p166, %p167
      %p169 = scmp.ne.s32.totalorder %s160, %s161
      %p170 = scmp.eq.s32.totalorder %s24, 0
      %p171 = por %p169, %p170
      %p172 = scmp.ne.s32.totalorder %s160, %s161
      %p173 = scmp.eq.s32.totalorder %s25, 1
      %p174 = por %p172, %p173
      %p176 = scmp.ne.s32.totalorder %s161, %s175
      %p177 = scmp.eq.s32.totalorder %s25, 0
      %p178 = por %p176, %p177
      %s180 = sadd.s32 %s179, 1
      %p183 = scmp.eq.s32.totalorder %s19, 1
      %p184 = scmp.ne.s32.totalorder %s179, %s181
      %p185 = scmp.eq.s32.totalorder %s19, 0
      %p186 = por %p184, %p185
      %p187 = scmp.ne.s32.totalorder %s179, %s181
      %p188 = scmp.eq.s32.totalorder %s24, 1
      %p189 = por %p187, %p188
      %p190 = scmp.ne.s32.totalorder %s181, %s182
      %p191 = scmp.eq.s32.totalorder %s24, 0
      %p192 = por %p190, %p191
      %p193 = scmp.ne.s32.totalorder %s181, %s182
      %p194 = scmp.eq.s32.totalorder %s25, 1
      %p195 = por %p193, %p194
      %p197 = scmp.ne.s32.totalorder %s182, %s196
      %p198 = scmp.eq.s32.totalorder %s25, 0
      %p199 = por %p197, %p198
      %s201 = sadd.s32 %s200, 1
      %p204 = scmp.eq.s32.totalorder %s19, 1
      %p205 = scmp.ne.s32.totalorder %s200, %s202
      %p206 = scmp.eq.s32.totalorder %s19, 0
      %p207 = por %p205, %p206
      %p208 = scmp.ne.s32.totalorder %s200, %s202
      %p209 = scmp.eq.s32.totalorder %s24, 1
      %p210 = por %p208, %p209
      %p211 = scmp.ne.s32.totalorder %s202, %s203
      %p212 = scmp.eq.s32.totalorder %s24, 0
      %p213 = por %p211, %p212
      %p214 = scmp.ne.s32.totalorder %s202, %s203
      %p215 = scmp.eq.s32.totalorder %s25, 1
      %p216 = por %p214, %p215
      %p218 = scmp.ne.s32.totalorder %s203, %s217
      %p219 = scmp.eq.s32.totalorder %s25, 0
      %p220 = por %p218, %p219
      %s221 = ssub.s32 %s19, %s26
      %p222 = scmp.eq.s32.totalorder %s221, 0
      %s224 = sadd.s32 %s223, 1
      %s225 = scalar_select %p222, %s223, %s224
      %p228 = pneg %p222
      %p229 = scmp.eq.s32.totalorder %s19, 1
      %p230 = por %p228, %p229
      %p231 = scmp.ne.s32.totalorder %s223, %s226
      %p232 = scmp.eq.s32.totalorder %s19, 0
      %p233 = por %p231, %p232
      %p234 = scmp.ne.s32.totalorder %s223, %s226
      %p235 = scmp.eq.s32.totalorder %s24, 1
      %p236 = por %p234, %p235
      %p237 = scmp.ne.s32.totalorder %s226, %s227
      %p238 = scmp.eq.s32.totalorder %s24, 0
      %p239 = por %p237, %p238
      %p240 = scmp.ne.s32.totalorder %s226, %s227
      %p241 = scmp.eq.s32.totalorder %s25, 1
      %p242 = por %p240, %p241
      %p244 = scmp.ne.s32.totalorder %s227, %s243
      %p245 = scmp.eq.s32.totalorder %s25, 0
      %p246 = por %p244, %p245
      %p247 = scmp.le.s32.totalorder 1, %s19
      %p248 = scmp.lt.s32.totalorder %s19, 3
      %p249 = pnand %p247, %p248
      %p250 = pneg %p249
      // Predicated region
      $region9: #{tpu_custom_call.1} parent=5 // pred_check
        _
      $region10: #{tpu_custom_call.1} parent=5 // pred_check_branch
        %252 = sbr.rel (%p249) target = $region12
      $region11: #{tpu_custom_call.1} parent=5 // pred_region
        %s253 = ssub.s32 %s19, 1
        // Predicated region
        $region13: #{tpu_custom_call.1} parent=11 // pred_check
          %p254 = pneg %p66
        $region14: #{tpu_custom_call.1} parent=11 // pred_check_branch
          %256 = sbr.rel (%p254) target = $region16
        $region15: #{tpu_custom_call.1} parent=11 // pred_region
          _
        $region16: #{tpu_custom_call.1} parent=11 // pred_fallthru
          _
        // Predicated region
        $region17: #{tpu_custom_call.1} parent=11 // pred_check
          %p257 = pneg %p87
        $region18: #{tpu_custom_call.1} parent=11 // pred_check_branch
          %259 = sbr.rel (%p257) target = $region20
        $region19: #{tpu_custom_call.1} parent=11 // pred_region
          _
        $region20: #{tpu_custom_call.1} parent=11 // pred_fallthru
          _
        // Predicated region
        $region21: #{tpu_custom_call.1} parent=11 // pred_check
          %p260 = pneg %p108
        $region22: #{tpu_custom_call.1} parent=11 // pred_check_branch
          %262 = sbr.rel (%p260) target = $region24
        $region23: #{tpu_custom_call.1} parent=11 // pred_region
          %s264 = ssub.s32 128, 128
          %265 = vsyncadd [#allocation3], %s264
          %s267 = sshll.u32 [#allocation2], 4
          %s268 = int_to_ptr.vmem [resolvable:$true] %s267
          %270 = dma.hbm_to_vmem [thread:$0]  %s3, 128, %s268, [#allocation3]
        $region24: #{tpu_custom_call.1} parent=11 // pred_fallthru
          _
        // Predicated region
        $region25: #{tpu_custom_call.1} parent=11 // pred_check
          %p271 = pneg %p129
        $region26: #{tpu_custom_call.1} parent=11 // pred_check_branch
          %273 = sbr.rel (%p271) target = $region28
        $region27: #{tpu_custom_call.1} parent=11 // pred_region
          _
        $region28: #{tpu_custom_call.1} parent=11 // pred_fallthru
          _
        // Predicated region
        $region29: #{tpu_custom_call.1} parent=11 // pred_check
          %p274 = pneg %p150
        $region30: #{tpu_custom_call.1} parent=11 // pred_check_branch
          %276 = sbr.rel (%p274) target = $region32
        $region31: #{tpu_custom_call.1} parent=11 // pred_region
          _
        $region32: #{tpu_custom_call.1} parent=11 // pred_fallthru
          _
        // Predicated region
        $region33: #{tpu_custom_call.1} parent=11 // pred_check
          %p277 = pneg %p171
        $region34: #{tpu_custom_call.1} parent=11 // pred_check_branch
          %279 = sbr.rel (%p277) target = $region36
        $region35: #{tpu_custom_call.1} parent=11 // pred_region
          _
        $region36: #{tpu_custom_call.1} parent=11 // pred_fallthru
          _
        // Predicated region
        $region37: #{tpu_custom_call.1} parent=11 // pred_check
          %p280 = pneg %p192
        $region38: #{tpu_custom_call.1} parent=11 // pred_check_branch
          %282 = sbr.rel (%p280) target = $region40
        $region39: #{tpu_custom_call.1} parent=11 // pred_region
          _
        $region40: #{tpu_custom_call.1} parent=11 // pred_fallthru
          _
        // Predicated region
        $region41: #{tpu_custom_call.1} parent=11 // pred_check
          %p283 = pneg %p213
        $region42: #{tpu_custom_call.1} parent=11 // pred_check_branch
          %285 = sbr.rel (%p283) target = $region44
        $region43: #{tpu_custom_call.1} parent=11 // pred_region
          _
        $region44: #{tpu_custom_call.1} parent=11 // pred_fallthru
          _
      $region12: #{tpu_custom_call.1} parent=5 // pred_fallthru
        _
      %p286 = scmp.lt.s32.totalorder %s19, 2
      // Predicated region
      $region45: #{tpu_custom_call.1} parent=5 // pred_check
        %p287 = pneg %p286
      $region46: #{tpu_custom_call.1} parent=5 // pred_check_branch
        %289 = sbr.rel (%p287) target = $region48
      $region47: #{tpu_custom_call.1} parent=5 // pred_region
        // Predicated region
        $region49: #{tpu_custom_call.1} parent=47 // pred_check
          %p290 = pneg %p39
        $region50: #{tpu_custom_call.1} parent=47 // pred_check_branch
          %292 = sbr.rel (%p290) target = $region52
        $region51: #{tpu_custom_call.1} parent=47 // pred_region
          %p293 = scmp.lt.s32.totalorder %s19, 1
          %s294 = scalar_select %p293, %s19, 1
          %s295 = smul.addr %s294, 2
          %s296 = smul.addr %s295, 8
          %s297 = scalar_lea.vmem %s0, %s296
        $region52: #{tpu_custom_call.1} parent=47 // pred_fallthru
          _
      $region48: #{tpu_custom_call.1} parent=5 // pred_fallthru
        _
      %p298 = scmp.le.s32.totalorder 1, %s19
      %p299 = scmp.lt.s32.totalorder %s19, 3
      %p300 = pnand %p298, %p299
      %p301 = pneg %p300
      // Predicated region
      $region53: #{tpu_custom_call.1} parent=5 // pred_check
        _
      $region54: #{tpu_custom_call.1} parent=5 // pred_check_branch
        %303 = sbr.rel (%p300) target = $region56
      $region55: #{tpu_custom_call.1} parent=5 // pred_region
        %s304 = ssub.s32 %s19, 1
        // Predicated region
        $region57: #{tpu_custom_call.1} parent=55 // pred_check
          %p305 = pneg %p108
        $region58: #{tpu_custom_call.1} parent=55 // pred_check_branch
          %307 = sbr.rel (%p305) target = $region60
        $region59: #{tpu_custom_call.1} parent=55 // pred_region
          %308 = dma.done [#allocation3], 128
        $region60: #{tpu_custom_call.1} parent=55 // pred_fallthru
          _
        %p309 = scmp.lt.s32.totalorder %s24, 1
        %s310 = scalar_select %p309, %s24, 1
        %s311 = smul.addr %s310, 2
        %s312 = smul.addr %s311, 8
        %s313 = scalar_lea.vmem %s0, %s312
        %p314 = pneg %p45
        %p315 = pneg %p42
        %p316 = pneg %p66
        %p317 = pneg %p63
        %p318 = pneg %p87
        %p319 = pneg %p84
        %p320 = pneg %p108
        %p321 = pneg %p105
        %p322 = pneg %p129
        %p323 = pneg %p126
        %p324 = pneg %p150
        %p325 = pneg %p147
        %p326 = pneg %p171
        %p327 = pneg %p168
        %p328 = pneg %p192
        %p329 = pneg %p189
        %p330 = pneg %p213
        %p331 = pneg %p210
        %p332 = pneg %p239
        %p333 = pneg %p236
        %s334 = sand.u32 %s226, 1
        %s335 = scalar_lea.sflag [#allocation4], %s334
        %s336 = sand.u32 %s226, 1
        %s337 = smul.addr %s336, 16
        %s338 = scalar_lea.vmem [#allocation5], %s337
        %p339 = scmp.lt.s32.totalorder %s24, 1
        %s340 = scalar_select %p339, %s24, 1
        %s341 = smul.addr %s340, 2
        %s342 = smul.addr %s341, 8
        %s343 = scalar_lea.vmem %s0, %s342
        %v344 = vld [vmem:[%s343] sm:$0xff]
        %v345 = vld [vmem:[%s343 + $0x8] sm:$0xff]
        %v346 = vadd.f32 %v344, %v345
        %347 = vadd.xlane.f32.xlu0 %v346
        %v348 = vpop.xlane.xlu0 %347
        %v349 = vmul.f32 %v348, 0.00390625
        %v350 = vld [vmem:[%s1] sm:$0xff]
        %v351 = vld [vmem:[%s1 + $0x8] sm:$0xff]
        %v352 = vld [vmem:[%s2] sm:$0xff]
        %v353 = vld [vmem:[%s2 + $0x8] sm:$0xff]
        %vm354 = vcmask 64512
        %v356 = vsel %vm354, %v350, 0
        %v359 = vsel %vm354, %v351, 0
        %361 = vmatprep.subr.mxu0 0.0
        %362 = vmatpush1.msra.mxu0 %v349
        %363 = vmatprep.subr.mxu0 0.0
        %364 = vmatpush1.msra.mxu0 0.0
        %365 = vmatprep.subr.mxu0 0.0
        %366 = vmatpush1.msra.mxu0 0.0
        %367 = vmatprep.subr.mxu0 0.0
        %368 = vmatpush1.msra.mxu0 0.0
        %369 = vmatprep.subr.mxu0 0.0
        %370 = vmatpush1.msra.mxu0 0.0
        %371 = vmatprep.subr.mxu0 0.0
        %372 = vmatpush1.msra.mxu0 0.0
        %373 = vmatprep.subr.mxu0 0.0
        %374 = vmatpush1.msra.mxu0 0.0
        %375 = vmatprep.subr.mxu0 0.0
        %376 = vmatpush1.msra.mxu0 0.0
        %377 = vmatprep.subr.mxu0 0.0
        %378 = vmatpush1.msra.mxu0 0.0
        %379 = vmatprep.subr.mxu0 0.0
        %380 = vmatpush1.msra.mxu0 0.0
        %381 = vmatprep.subr.mxu0 0.0
        %382 = vmatpush1.msra.mxu0 0.0
        %383 = vmatprep.subr.mxu0 0.0
        %384 = vmatpush1.msra.mxu0 0.0
        %385 = vmatprep.subr.mxu0 0.0
        %386 = vmatpush1.msra.mxu0 0.0
        %387 = vmatprep.subr.mxu0 0.0
        %388 = vmatpush1.msra.mxu0 0.0
        %389 = vmatprep.subr.mxu0 0.0
        %390 = vmatpush1.msra.mxu0 0.0
        %391 = vmatprep.subr.mxu0 0.0
        %392 = vmatpush1.msra.mxu0 0.0
        %393 = vmatprep.subr.mxu0 0.0
        %394 = vmatpush1.msra.mxu0 0.0
        %395 = vmatprep.subr.mxu0 0.0
        %396 = vmatpush1.msra.mxu0 0.0
        %397 = vmatprep.subr.mxu0 0.0
        %398 = vmatpush1.msra.mxu0 0.0
        %399 = vmatprep.subr.mxu0 0.0
        %400 = vmatpush1.msra.mxu0 0.0
        %401 = vmatprep.subr.mxu0 0.0
        %402 = vmatpush1.msra.mxu0 0.0
        %403 = vmatprep.subr.mxu0 0.0
        %404 = vmatpush1.msra.mxu0 0.0
        %405 = vmatprep.subr.mxu0 0.0
        %406 = vmatpush1.msra.mxu0 0.0
        %407 = vmatprep.subr.mxu0 0.0
        %408 = vmatpush1.msra.mxu0 0.0
        %409 = vmatprep.subr.mxu0 0.0
        %410 = vmatpush1.msra.mxu0 0.0
        %411 = vmatprep.subr.mxu0 0.0
        %412 = vmatpush1.msra.mxu0 0.0
        %413 = vmatprep.subr.mxu0 0.0
        %414 = vmatpush1.msra.mxu0 0.0
        %415 = vmatprep.subr.mxu0 0.0
        %416 = vmatpush1.msra.mxu0 0.0
        %417 = vmatprep.subr.mxu0 0.0
        %418 = vmatpush1.msra.mxu0 0.0
        %419 = vmatprep.subr.mxu0 0.0
        %420 = vmatpush1.msra.mxu0 0.0
        %421 = vmatprep.subr.mxu0 0.0
        %422 = vmatpush1.msra.mxu0 0.0
        %423 = vmatprep.subr.mxu0 0.0
        %424 = vmatpush1.msra.mxu0 0.0
        %425 = vmatprep.mubr.f32.mxu0 0.0
        %426 = vmatmul.mubr.f32.gmra.mrb[0].mxu0 %v356
        %v427 = vpop.f32.mrb[0].mxu0
        %v428 = vadd.f32 %v352, %v427
        %v429 = vpop.f32.mrb[0].mxu0
        %430 = vmatprep.mubr.f32.mxu0 0.0
        %431 = vmatmul.mubr.f32.gmra.mrb[0].mxu0 %v359
        %v432 = vpop.f32.mrb[0].mxu0
        %v433 = vadd.f32 %v353, %v432
        %v434 = vpop.f32.mrb[0].mxu0
        %435 = vdwg.mxu0
        %v436 = vmax.f32 %v428, 0.0
        %v437 = vmax.f32 %v433, 0.0
        %v438 = vld [vmem:[#allocation2] sm:$0xff]
        %v439 = vld [vmem:[%s4] sm:$0xff]
        %v441 = vsel %vm354, %v438, 0
        %443 = vmatprep.subr.mxu0 0.0
        %444 = vmatpush1.msra.mxu0 %v436
        %445 = vmatprep.subr.mxu0 0.0
        %446 = vmatpush1.msra.mxu0 0.0
        %447 = vmatprep.subr.mxu0 0.0
        %448 = vmatpush1.msra.mxu0 0.0
        %449 = vmatprep.subr.mxu0 0.0
        %450 = vmatpush1.msra.mxu0 0.0
        %451 = vmatprep.subr.mxu0 0.0
        %452 = vmatpush1.msra.mxu0 0.0
        %453 = vmatprep.subr.mxu0 0.0
        %454 = vmatpush1.msra.mxu0 0.0
        %455 = vmatprep.subr.mxu0 0.0
        %456 = vmatpush1.msra.mxu0 0.0
        %457 = vmatprep.subr.mxu0 0.0
        %458 = vmatpush1.msra.mxu0 0.0
        %459 = vmatprep.subr.mxu0 0.0
        %460 = vmatpush1.msra.mxu0 0.0
        %461 = vmatprep.subr.mxu0 0.0
        %462 = vmatpush1.msra.mxu0 0.0
        %463 = vmatprep.subr.mxu0 0.0
        %464 = vmatpush1.msra.mxu0 0.0
        %465 = vmatprep.subr.mxu0 0.0
        %466 = vmatpush1.msra.mxu0 0.0
        %467 = vmatprep.subr.mxu0 0.0
        %468 = vmatpush1.msra.mxu0 0.0
        %469 = vmatprep.subr.mxu0 0.0
        %470 = vmatpush1.msra.mxu0 0.0
        %471 = vmatprep.subr.mxu0 0.0
        %472 = vmatpush1.msra.mxu0 0.0
        %473 = vmatprep.subr.mxu0 0.0
        %474 = vmatpush1.msra.mxu0 0.0
        %475 = vmatprep.subr.mxu0 0.0
        %476 = vmatpush1.msra.mxu0 0.0
        %477 = vmatprep.subr.mxu0 0.0
        %478 = vmatpush1.msra.mxu0 0.0
        %479 = vmatprep.subr.mxu0 0.0
        %480 = vmatpush1.msra.mxu0 0.0
        %481 = vmatprep.subr.mxu0 0.0
        %482 = vmatpush1.msra.mxu0 0.0
        %483 = vmatprep.subr.mxu0 0.0
        %484 = vmatpush1.msra.mxu0 0.0
        %485 = vmatprep.subr.mxu0 0.0
        %486 = vmatpush1.msra.mxu0 0.0
        %487 = vmatprep.subr.mxu0 0.0
        %488 = vmatpush1.msra.mxu0 0.0
        %489 = vmatprep.subr.mxu0 0.0
        %490 = vmatpush1.msra.mxu0 0.0
        %491 = vmatprep.subr.mxu0 0.0
        %492 = vmatpush1.msra.mxu0 0.0
        %493 = vmatprep.subr.mxu0 0.0
        %494 = vmatpush1.msra.mxu0 0.0
        %495 = vmatprep.subr.mxu0 0.0
        %496 = vmatpush1.msra.mxu0 0.0
        %497 = vmatprep.subr.mxu0 0.0
        %498 = vmatpush1.msra.mxu0 0.0
        %499 = vmatprep.subr.mxu0 0.0
        %500 = vmatpush1.msra.mxu0 0.0
        %501 = vmatprep.subr.mxu0 0.0
        %502 = vmatpush1.msra.mxu0 0.0
        %503 = vmatprep.subr.mxu0 0.0
        %504 = vmatpush1.msra.mxu0 0.0
        %505 = vmatprep.subr.mxu0 0.0
        %506 = vmatpush1.msra.mxu0 0.0
        %507 = vmatprep.mubr.f32.mxu0 0.0
        %508 = vmatmul.mubr.f32.gmra.mrb[0].mxu0 %v441
        %v509 = vpop.f32.mrb[0].mxu0
        %v510 = vadd.f32 %v439, %v509
        %v511 = vpop.f32.mrb[0].mxu0
        %512 = vdwg.mxu0
        %v513 = vxor.u32 %v510, 2147483648
        %v514 = vmul.f32 %v513, 1.442695
        %v515 = vpow.pop %v514
        %v516 = vadd.f32 %v515, 1.0
        %v517 = vrcp.pop %v516
        %v518 = vmul.f32 1.0, %v517
        %v519 = vld [vmem:[%s5] sm:$0xff]
        %v520 = vld [vmem:[%s6] sm:$0xff]
        %v522 = vsel %vm354, %v519, 0
        %524 = vmatprep.subr.mxu0 0.0
        %525 = vmatpush1.msra.mxu0 %v437
        %526 = vmatprep.subr.mxu0 0.0
        %527 = vmatpush1.msra.mxu0 0.0
        %528 = vmatprep.subr.mxu0 0.0
        %529 = vmatpush1.msra.mxu0 0.0
        %530 = vmatprep.subr.mxu0 0.0
        %531 = vmatpush1.msra.mxu0 0.0
        %532 = vmatprep.subr.mxu0 0.0
        %533 = vmatpush1.msra.mxu0 0.0
        %534 = vmatprep.subr.mxu0 0.0
        %535 = vmatpush1.msra.mxu0 0.0
        %536 = vmatprep.subr.mxu0 0.0
        %537 = vmatpush1.msra.mxu0 0.0
        %538 = vmatprep.subr.mxu0 0.0
        %539 = vmatpush1.msra.mxu0 0.0
        %540 = vmatprep.subr.mxu0 0.0
        %541 = vmatpush1.msra.mxu0 0.0
        %542 = vmatprep.subr.mxu0 0.0
        %543 = vmatpush1.msra.mxu0 0.0
        %544 = vmatprep.subr.mxu0 0.0
        %545 = vmatpush1.msra.mxu0 0.0
        %546 = vmatprep.subr.mxu0 0.0
        %547 = vmatpush1.msra.mxu0 0.0
        %548 = vmatprep.subr.mxu0 0.0
        %549 = vmatpush1.msra.mxu0 0.0
        %550 = vmatprep.subr.mxu0 0.0
        %551 = vmatpush1.msra.mxu0 0.0
        %552 = vmatprep.subr.mxu0 0.0
        %553 = vmatpush1.msra.mxu0 0.0
        %554 = vmatprep.subr.mxu0 0.0
        %555 = vmatpush1.msra.mxu0 0.0
        %556 = vmatprep.subr.mxu0 0.0
        %557 = vmatpush1.msra.mxu0 0.0
        %558 = vmatprep.subr.mxu0 0.0
        %559 = vmatpush1.msra.mxu0 0.0
        %560 = vmatprep.subr.mxu0 0.0
        %561 = vmatpush1.msra.mxu0 0.0
        %562 = vmatprep.subr.mxu0 0.0
        %563 = vmatpush1.msra.mxu0 0.0
        %564 = vmatprep.subr.mxu0 0.0
        %565 = vmatpush1.msra.mxu0 0.0
        %566 = vmatprep.subr.mxu0 0.0
        %567 = vmatpush1.msra.mxu0 0.0
        %568 = vmatprep.subr.mxu0 0.0
        %569 = vmatpush1.msra.mxu0 0.0
        %570 = vmatprep.subr.mxu0 0.0
        %571 = vmatpush1.msra.mxu0 0.0
        %572 = vmatprep.subr.mxu0 0.0
        %573 = vmatpush1.msra.mxu0 0.0
        %574 = vmatprep.subr.mxu0 0.0
        %575 = vmatpush1.msra.mxu0 0.0
        %576 = vmatprep.subr.mxu0 0.0
        %577 = vmatpush1.msra.mxu0 0.0
        %578 = vmatprep.subr.mxu0 0.0
        %579 = vmatpush1.msra.mxu0 0.0
        %580 = vmatprep.subr.mxu0 0.0
        %581 = vmatpush1.msra.mxu0 0.0
        %582 = vmatprep.subr.mxu0 0.0
        %583 = vmatpush1.msra.mxu0 0.0
        %584 = vmatprep.subr.mxu0 0.0
        %585 = vmatpush1.msra.mxu0 0.0
        %586 = vmatprep.subr.mxu0 0.0
        %587 = vmatpush1.msra.mxu0 0.0
        %588 = vmatprep.mubr.f32.mxu0 0.0
        %589 = vmatmul.mubr.f32.gmra.mrb[0].mxu0 %v522
        %v590 = vpop.f32.mrb[0].mxu0
        %v591 = vadd.f32 %v520, %v590
        %v592 = vpop.f32.mrb[0].mxu0
        %593 = vdwg.mxu0
        %v594 = vxor.u32 %v591, 2147483648
        %v595 = vmul.f32 %v594, 1.442695
        %v596 = vpow.pop %v595
        %v597 = vadd.f32 %v596, 1.0
        %v598 = vrcp.pop %v597
        %v599 = vmul.f32 1.0, %v598
        %v600 = vld [vmem:[%s7] sm:$0xff]
        %v601 = vld [vmem:[%s7 + $0x8] sm:$0xff]
        %603 = vset.pattern.permute.xlu0 0
        %604 = vperm.xlu0 %603, %v518
        %v605 = vpop.permute.xlu0 %604
        %v607 = vmul.f32 %v605, %v600
        %v608 = vmul.f32 %v605, %v601
        %v609 = vadd.f32 %v344, %v607
        %v610 = vadd.f32 %v345, %v608
        %v611 = vld [vmem:[%s8] sm:$0xff]
        %v612 = vld [vmem:[%s8 + $0x8] sm:$0xff]
        %614 = vset.pattern.permute.xlu0 0
        %615 = vperm.xlu0 %614, %v599
        %v616 = vpop.permute.xlu0 %615
        %v618 = vmul.f32 %v616, %v611
        %v619 = vmul.f32 %v616, %v612
        %v620 = vadd.f32 %v609, %v618
        %v621 = vadd.f32 %v610, %v619
        %622 = vst [vmem:[%s338] sm:$0xff] %v620
        %623 = vst [vmem:[%s338 + $0x8] sm:$0xff] %v621
        %s624 = sand.u32 %s226, 1
        %s625 = scalar_lea.sflag [#allocation4], %s624
        %s626 = sand.u32 %s226, 1
        %s627 = smul.addr %s626, 16
        %s628 = scalar_lea.vmem [#allocation5], %s627
        // Predicated region
        $region61: #{tpu_custom_call.1} parent=55 // pred_check
          %p629 = pneg %p236
        $region62: #{tpu_custom_call.1} parent=55 // pred_check_branch
          %631 = sbr.rel (%p629) target = $region64
        $region63: #{tpu_custom_call.1} parent=55 // pred_region
          %s633 = ssub.s32 256, 256
          %634 = vsyncadd %s625, %s633
          %s635 = smul.addr %s24, 2
          %s636 = smul.addr %s635, 128
          %s637 = scalar_lea.hbm %s9, %s636
          %s639 = sshll.u32 %s628, 4
          %s640 = int_to_ptr.vmem [resolvable:$true] %s639
          %642 = dma.vmem_to_hbm [thread:$0]  %s640, 256, %s637, %s625
        $region64: #{tpu_custom_call.1} parent=55 // pred_fallthru
          _
      $region56: #{tpu_custom_call.1} parent=5 // pred_fallthru
        _
      %p643 = scmp.le.s32.totalorder 2, %s19
      // Predicated region
      $region65: #{tpu_custom_call.1} parent=5 // pred_check
        %p644 = pneg %p643
      $region66: #{tpu_custom_call.1} parent=5 // pred_check_branch
        %646 = sbr.rel (%p644) target = $region68
      $region67: #{tpu_custom_call.1} parent=5 // pred_region
        %s647 = ssub.s32 %s19, 2
        // Predicated region
        $region69: #{tpu_custom_call.1} parent=67 // pred_check
          %p648 = pneg %p242
        $region70: #{tpu_custom_call.1} parent=67 // pred_check_branch
          %650 = sbr.rel (%p648) target = $region72
        $region71: #{tpu_custom_call.1} parent=67 // pred_region
          %s651 = sand.u32 %s227, 1
          %s652 = scalar_lea.sflag [#allocation4], %s651
          %s653 = sand.u32 %s227, 1
          %s654 = smul.addr %s653, 16
          %s655 = scalar_lea.vmem [#allocation5], %s654
          %656 = dma.done %s652, 256
        $region72: #{tpu_custom_call.1} parent=67 // pred_fallthru
          _
      $region68: #{tpu_custom_call.1} parent=5 // pred_fallthru
        _
    $region6: #{tpu_custom_call.1} parent=1 // loop_footer
      %s23 = sadd.s32 1, %s19
    $region7: #{tpu_custom_call.1} parent=1 // loop_footer_branch
      %18 = sbr.rel target = $region3
    $region8: #{tpu_custom_call.1} parent=1 // loop_exit
      _
    %657 = vsyncpa [#allocation3], 1
    %s658 = scalar_lea.sflag [#allocation3], 1
    %659 = vsyncpa %s658, 1
    %660 = vsyncpa [#allocation4], 1
    %s661 = scalar_lea.sflag [#allocation4], 1
    %662 = vsyncpa %s661, 1

</llo_original>
